<compile_context>
chip_gen: v7x
topology: tpu7x:2x2x1
jax: 0.10.0
libtpu: 0.0.40
codegen_flags: <defaults>
</compile_context>

<pallas_src>
import jax
import jax.numpy as jnp
import numpy as np
from jax import lax
from jax.experimental import pallas as pl
from jax.experimental.pallas import tpu as pltpu


_STATIC_UNROLL_MAX_T = 16   # static Python unroll below this; lax.fori_loop above


def _encoder_lstm_kernel(x_ref, wih0_ref, whh0_ref, b0_ref,
                         wih1_ref, whh1_ref, b1_ref,
                         out_ref, gbuf):
    """One grid step = one independent batch block; full 2-layer recurrence in-kernel.

    x_ref   : (1, T*bb, D)  time-major rows within the batch block
    w*_ref  : (in, 4H) pre-transposed, gate-permuted weights; b*_ref: (1, 4H) = b_ih+b_hh
    out_ref : (1, bb, H)    last-step layer-1 hidden state
    gbuf    : VMEM (T*bb, 4H) hoisted layer-0 input-side gates
    """
    TB = x_ref.shape[1]
    bb, H = out_ref.shape[1], out_ref.shape[2]
    T = TB // bb
    wdt = wih0_ref.dtype  # MXU operand dtype (bf16 in production, f32 for tight checks)

    # ---- hoisted layer-0 input-side GEMM for all T steps (one big MXU op) ----------
    x2d = x_ref[0].astype(wdt)                                           # (T*bb, D)
    gbuf[...] = (jnp.dot(x2d, wih0_ref[...],
                         preferred_element_type=jnp.float32)
                 + b0_ref[...]).astype(gbuf.dtype)                       # (T*bb, 4H)

    whh0 = whh0_ref[...]
    wih1 = wih1_ref[...]
    whh1 = whh1_ref[...]
    b1 = b1_ref[...].astype(jnp.float32)

    def cell(gates, c):
        # Gate columns were permuted by the wrapper to [i, f, o | g]:
        # sigmoid over 3H lanes, tanh over 1H lanes (+ tanh(c)) => 5H EUP lanes / step.
        sg = jax.nn.sigmoid(gates[:, :3 * H])
        g = jnp.tanh(gates[:, 3 * H:])
        i, f, o = sg[:, 0:H], sg[:, H:2 * H], sg[:, 2 * H:3 * H]
        c_new = f * c + i * g
        h_new = o * jnp.tanh(c_new)
        return h_new, c_new

    def fused_step(row0, carry):
        """Layer-0 step k (gate rows start at row0 = k*bb) fused with layer-1 step k-1.
        Layer 1 only reads the *previous* h0, so the two matmul->EUP->VPU chains are
        independent within the iteration and interleave in the pipeline."""
        h0, c0, h1, c1 = carry
        h0w = h0.astype(wdt)
        g0 = (gbuf[pl.ds(row0, bb), :].astype(jnp.float32)
              + jnp.dot(h0w, whh0, preferred_element_type=jnp.float32))
        g1 = (jnp.dot(h0w, wih1, preferred_element_type=jnp.float32)
              + jnp.dot(h1.astype(wdt), whh1, preferred_element_type=jnp.float32)
              + b1)
        h0n, c0n = cell(g0, c0)
        h1n, c1n = cell(g1, c1)
        return h0n, c0n, h1n, c1n

    zeros = jnp.zeros((bb, H), jnp.float32)

    # Prologue: layer-0 step 0 (h0 == 0, so the hh matmul is skipped).
    h0, c0 = cell(gbuf[pl.ds(0, bb), :].astype(jnp.float32), zeros)
    carry = (h0, c0, zeros, zeros)

    # Pipelined main loop over k = 1 .. T-1.
    if T <= _STATIC_UNROLL_MAX_T:
        for k in range(1, T):
            carry = fused_step(k * bb, carry)
    else:
        def body(k, c):
            return fused_step(pl.multiple_of(k * bb, bb), c)
        carry = lax.fori_loop(1, T, body, carry, unroll=4)
    h0, c0, h1, c1 = carry

    # Epilogue: layer-1 step T-1.
    g1 = (jnp.dot(h0.astype(wdt), wih1, preferred_element_type=jnp.float32)
          + jnp.dot(h1.astype(wdt), whh1, preferred_element_type=jnp.float32)
          + b1)
    h1, _ = cell(g1, c1)

    out_ref[0] = h1.astype(out_ref.dtype)


def _permute_gate_columns(w, H):
    """Column order [i | f | g | o] (PyTorch) -> [i | f | o | g]."""
    return jnp.concatenate(
        [w[..., 0:2 * H], w[..., 3 * H:4 * H], w[..., 2 * H:3 * H]], axis=-1)


def _pick_batch_block(B, T, D, H, *, max_bb=256, min_blocks=1,
                      vmem_budget_bytes=24 << 20):
    """Largest divisor of B that (a) keeps bb-scaling VMEM under budget, (b) is <= max_bb
    (128 is the better target on v5e's 4x128^2 MXU), and (c) leaves at least `min_blocks`
    grid steps — pass min_blocks=2 on v7x so the 'parallel' axis feeds both TensorCores."""
    per_sample = 4 * (2 * T * D + T * 4 * H + 2 * H)  # x (2 bufs) + gate scratch + out, f32
    cap = min(max_bb,
              max(1, B // max(min_blocks, 1)),
              max(1, vmem_budget_bytes // max(per_sample, 1)))
    return max(d for d in range(1, B + 1) if B % d == 0 and d <= cap)


def encoder_lstm_forward(x, params, *, batch_block=None,
                         weight_dtype=jnp.bfloat16,
                         gate_dtype=jnp.float32,
                         min_batch_blocks=1):
    """x: (B, T, D) float32.  Returns (B, 1, H) = last time step of the layer-2 output."""
    B, T, D = x.shape
    wih0, whh0, b0, wih1, whh1, b1 = params
    H = whh0.shape[0]

    if batch_block is None:
        batch_block = _pick_batch_block(B, T, D, H, min_blocks=min_batch_blocks)
    bb = batch_block
    assert B % bb == 0, (B, bb)
    nb = B // bb

    # (B,T,D) -> (nb, T*bb, D): time-major rows inside each batch block.
    x_blocks = (x.reshape(nb, bb, T, D)
                 .transpose(0, 2, 1, 3)
                 .reshape(nb, T * bb, D))

    # Permute gate columns to [i, f, o | g]; cast only the MXU weight operands.
    perm = lambda a: _permute_gate_columns(a, H)
    wih0p, whh0p, wih1p, whh1p = (perm(w).astype(weight_dtype)
                                  for w in (wih0, whh0, wih1, whh1))
    b0p, b1p = perm(b0), perm(b1)   # biases stay f32 (added after f32 accumulation)

    full2d = lambda shape: pl.BlockSpec(shape, lambda j: (0, 0))

    grid_spec = pltpu.PrefetchScalarGridSpec(
        num_scalar_prefetch=0,
        grid=(nb,),
        in_specs=[
            pl.BlockSpec((1, T * bb, D), lambda j: (j, 0, 0)),  # x batch block
            full2d((D, 4 * H)),                                 # W_ih layer 0
            full2d((H, 4 * H)),                                 # W_hh layer 0
            full2d((1, 4 * H)),                                 # bias layer 0
            full2d((H, 4 * H)),                                 # W_ih layer 1
            full2d((H, 4 * H)),                                 # W_hh layer 1
            full2d((1, 4 * H)),                                 # bias layer 1
        ],
        out_specs=pl.BlockSpec((1, bb, H), lambda j: (j, 0, 0)),
        scratch_shapes=[
            pltpu.VMEM((T * bb, 4 * H), gate_dtype),   # hoisted input-side gates
        ],
    )

    # Explicit VMEM budget for this tiling (double-buffered blocks + scratch).
    wbytes = np.dtype(weight_dtype).itemsize
    gbytes = np.dtype(gate_dtype).itemsize
    est = (2 * T * bb * D * 4                      # x block, 2 buffers, f32
           + T * bb * 4 * H * gbytes               # gate scratch
           + 2 * (D + 3 * H) * 4 * H * wbytes      # weights, 2 buffers each
           + 2 * 2 * 4 * H * 4                     # biases, 2 buffers each
           + 2 * bb * H * 4)                       # out block, 2 buffers
    vmem_limit = int(min(128 << 20, max(32 << 20, int(est * 1.5))))

    out = pl.pallas_call(
        _encoder_lstm_kernel,
        out_shape=jax.ShapeDtypeStruct((nb, bb, H), jnp.float32),
        grid_spec=grid_spec,
        compiler_params=pltpu.CompilerParams(
            dimension_semantics=("parallel",),      # batch blocks are independent
            vmem_limit_bytes=vmem_limit),
    )(x_blocks, wih0p, whh0p, b0p, wih1p, whh1p, b1p)

    return out.reshape(B, H)[:, None, :]


def encoder_lstm_reference(x, params):
    """Pure-JAX reference of the same forward (for correctness checking)."""
    wih0, whh0, b0, wih1, whh1, b1 = params
    B = x.shape[0]
    H = whh0.shape[0]

    def run_layer(inp, wih, whh, b):
        def step(carry, x_t):
            h, c = carry
            g = x_t @ wih + h @ whh + b
            i = jax.nn.sigmoid(g[:, 0 * H:1 * H])
            f = jax.nn.sigmoid(g[:, 1 * H:2 * H])
            gg = jnp.tanh(g[:, 2 * H:3 * H])
            o = jax.nn.sigmoid(g[:, 3 * H:4 * H])
            c = f * c + i * gg
            h = o * jnp.tanh(c)
            return (h, c), h

        init = (jnp.zeros((B, H), jnp.float32), jnp.zeros((B, H), jnp.float32))
        _, ys = lax.scan(step, init, jnp.transpose(inp, (1, 0, 2)))
        return jnp.transpose(ys, (1, 0, 2))

    y0 = run_layer(x, wih0, whh0, b0)
    y1 = run_layer(y0, wih1, whh1, b1)
    return y1[:, -1, :][:, None, :]


def make_params(key, input_size, hidden_size):
    """Deterministic synthetic parameters mirroring nn.LSTM's shapes.
    Layer-0 ih/hh weights use orthogonal init with gain sqrt(2) (like the module);
    everything else uses uniform(-1/sqrt(H), 1/sqrt(H)) like PyTorch's default."""
    D, H = input_size, hidden_size
    k = jax.random.split(key, 8)
    ortho = jax.nn.initializers.orthogonal(scale=2.0 ** 0.5)
    bound = 1.0 / (H ** 0.5)
    uni = lambda kk, shape: jax.random.uniform(kk, shape, jnp.float32, -bound, bound)

    wih0 = ortho(k[0], (4 * H, D), jnp.float32).T              # (D, 4H)
    whh0 = ortho(k[1], (4 * H, H), jnp.float32).T              # (H, 4H)
    b0 = (uni(k[2], (4 * H,)) + uni(k[3], (4 * H,)))[None, :]  # b_ih + b_hh
    wih1 = uni(k[4], (4 * H, H)).T                             # layer-1 input is H-wide
    whh1 = uni(k[5], (4 * H, H)).T
    b1 = (uni(k[6], (4 * H,)) + uni(k[7], (4 * H,)))[None, :]
    return (wih0, whh0, b0, wih1, whh1, b1)


if __name__ == "__main__":
    B, T, D, H = 2, 8, 16, 32   # batch, seq, input_size, hidden_size; n_layers = 2

    key = jax.random.PRNGKey(0)
    kx, kp, kx2 = jax.random.split(key, 3)
    x = jax.random.normal(kx, (B, T, D), jnp.float32)
    params = make_params(kp, D, H)
    ref = encoder_lstm_reference(x, params)

    # 1) f32 MXU operands: tight check vs the pure-JAX reference (static-unroll path).
    fwd_f32 = jax.jit(lambda xx, pp: encoder_lstm_forward(
        xx, pp, weight_dtype=jnp.float32))
    out = jax.block_until_ready(fwd_f32(x, params))
    assert out.shape == (B, 1, H), out.shape
    assert jnp.allclose(out, ref, rtol=1e-5, atol=1e-5), \
        f"f32 max abs err {jnp.max(jnp.abs(out - ref))}"

    # 2) production config: bf16 MXU operands + bf16 gate scratch (state stays f32).
    fwd_bf16 = jax.jit(lambda xx, pp: encoder_lstm_forward(
        xx, pp, weight_dtype=jnp.bfloat16, gate_dtype=jnp.bfloat16))
    out_bf = jax.block_until_ready(fwd_bf16(x, params))
    assert jnp.allclose(out_bf, ref, rtol=5e-2, atol=5e-2), \
        f"bf16 max abs err {jnp.max(jnp.abs(out_bf - ref))}"

    # 3) longer sequence + two batch blocks: exercises the lax.fori_loop recurrence path
    #    and nb>1 on the "parallel" grid axis (v7x megacore sharding).
    B2, T2 = 16, 40
    x2 = jax.random.normal(kx2, (B2, T2, D), jnp.float32)
    fwd_long = jax.jit(lambda xx, pp: encoder_lstm_forward(
        xx, pp, weight_dtype=jnp.float32, min_batch_blocks=2))
    out2 = jax.block_until_ready(fwd_long(x2, params))
    ref2 = encoder_lstm_reference(x2, params)
    assert out2.shape == (B2, 1, H), out2.shape
    assert jnp.allclose(out2, ref2, rtol=1e-4, atol=1e-4), \
        f"long-seq max abs err {jnp.max(jnp.abs(out2 - ref2))}"

    print("KERNEL_OK")
</pallas_src>

<mosaic_0001>
module attributes {stable_mosaic.version = 11 : i64} {
  func.func @_encoder_lstm_kernel(%arg0: i32, %arg1: memref<1x16x16xf32, #tpu.memory_space<vmem>>, %arg2: memref<16x128xf32, #tpu.memory_space<vmem>>, %arg3: memref<32x128xf32, #tpu.memory_space<vmem>>, %arg4: memref<1x128xf32, #tpu.memory_space<vmem>>, %arg5: memref<32x128xf32, #tpu.memory_space<vmem>>, %arg6: memref<32x128xf32, #tpu.memory_space<vmem>>, %arg7: memref<1x128xf32, #tpu.memory_space<vmem>>, %arg8: memref<1x2x32xf32, #tpu.memory_space<vmem>>, %arg9: memref<16x128xf32, #tpu.memory_space<vmem>>) attributes {dimension_semantics = [#tpu.dimension_semantics<parallel>], iteration_bounds = array<i64: 1>, scalar_prefetch = 0 : i64, scratch_operands = 1 : i64, tpu.core_type = #tpu.core_type<tc>, window_params = [{transform_indices = @transform_0, window_bounds = array<i64: 1, 16, 16>}, {pipeline_mode = #tpu.pipeline_mode<synchronous>, transform_indices = @transform_1, window_bounds = array<i64: 16, 128>}, {pipeline_mode = #tpu.pipeline_mode<synchronous>, transform_indices = @transform_2, window_bounds = array<i64: 32, 128>}, {pipeline_mode = #tpu.pipeline_mode<synchronous>, transform_indices = @transform_3, window_bounds = array<i64: 1, 128>}, {pipeline_mode = #tpu.pipeline_mode<synchronous>, transform_indices = @transform_4, window_bounds = array<i64: 32, 128>}, {pipeline_mode = #tpu.pipeline_mode<synchronous>, transform_indices = @transform_5, window_bounds = array<i64: 32, 128>}, {pipeline_mode = #tpu.pipeline_mode<synchronous>, transform_indices = @transform_6, window_bounds = array<i64: 1, 128>}, {transform_indices = @transform_7, window_bounds = array<i64: 1, 2, 32>}]} {
    %c0 = arith.constant 0 : index
    %c0_0 = arith.constant 0 : index
    %c0_1 = arith.constant 0 : index
    %0 = vector.load %arg1[%c0, %c0_0, %c0_1] : memref<1x16x16xf32, #tpu.memory_space<vmem>>, vector<1x16x16xf32>
    %1 = vector.shape_cast %0 : vector<1x16x16xf32> to vector<16x16xf32>
    %c0_2 = arith.constant 0 : index
    %c0_3 = arith.constant 0 : index
    %2 = vector.load %arg2[%c0_2, %c0_3] : memref<16x128xf32, #tpu.memory_space<vmem>>, vector<16x128xf32>
    %cst = arith.constant dense<0.000000e+00> : vector<16x128xf32>
    %3 = tpu.matmul %1, %2, %cst {dimension_numbers = #tpu.dot_dimension_numbers<[1], [0], [0], [1], [0, 0, 1, 1], [], []>} : vector<16x16xf32>, vector<16x128xf32>, vector<16x128xf32> -> vector<16x128xf32>
    %c0_4 = arith.constant 0 : index
    %c0_5 = arith.constant 0 : index
    %4 = vector.load %arg4[%c0_4, %c0_5] : memref<1x128xf32, #tpu.memory_space<vmem>>, vector<1x128xf32>
    %5 = vector.broadcast %4 : vector<1x128xf32> to vector<16x128xf32>
    %6 = arith.addf %3, %5 : vector<16x128xf32>
    %c0_6 = arith.constant 0 : index
    %c0_7 = arith.constant 0 : index
    %7 = vector.load %arg9[%c0_6, %c0_7] : memref<16x128xf32, #tpu.memory_space<vmem>>, vector<16x128xf32>
    tpu.vector_store %arg9[%c0_6, %c0_7], %6 {strides = array<i32>} : memref<16x128xf32, #tpu.memory_space<vmem>>, vector<16x128xf32>,
    %c0_8 = arith.constant 0 : index
    %c0_9 = arith.constant 0 : index
    %8 = vector.load %arg3[%c0_8, %c0_9] : memref<32x128xf32, #tpu.memory_space<vmem>>, vector<32x128xf32>
    %c0_10 = arith.constant 0 : index
    %c0_11 = arith.constant 0 : index
    %9 = vector.load %arg5[%c0_10, %c0_11] : memref<32x128xf32, #tpu.memory_space<vmem>>, vector<32x128xf32>
    %c0_12 = arith.constant 0 : index
    %c0_13 = arith.constant 0 : index
    %10 = vector.load %arg6[%c0_12, %c0_13] : memref<32x128xf32, #tpu.memory_space<vmem>>, vector<32x128xf32>
    %c0_14 = arith.constant 0 : index
    %c0_15 = arith.constant 0 : index
    %11 = vector.load %arg7[%c0_14, %c0_15] : memref<1x128xf32, #tpu.memory_space<vmem>>, vector<1x128xf32>
    %cst_16 = arith.constant 0.000000e+00 : f32
    %12 = vector.broadcast %cst_16 : f32 to vector<2x32xf32>
    %c0_17 = arith.constant 0 : index
    %c0_18 = arith.constant 0 : index
    %13 = vector.load %arg9[%c0_17, %c0_18] : memref<16x128xf32, #tpu.memory_space<vmem>>, vector<2x128xf32>
    %14 = vector.extract_strided_slice %13 {offsets = [0, 0], sizes = [2, 96], strides = [1, 1]} : vector<2x128xf32> to vector<2x96xf32>
    %15 = arith.negf %14 : vector<2x96xf32>
    %16 = math.exp %15 : vector<2x96xf32>
    %cst_19 = arith.constant 1.000000e+00 : f32
    %17 = vector.broadcast %cst_19 : f32 to vector<2x96xf32>
    %18 = arith.addf %17, %16 : vector<2x96xf32>
    %19 = arith.divf %17, %18 : vector<2x96xf32>
    %20 = vector.extract_strided_slice %13 {offsets = [0, 96], sizes = [2, 32], strides = [1, 1]} : vector<2x128xf32> to vector<2x32xf32>
    %21 = math.tanh %20 : vector<2x32xf32>
    %22 = vector.extract_strided_slice %19 {offsets = [0, 0], sizes = [2, 32], strides = [1, 1]} : vector<2x96xf32> to vector<2x32xf32>
    %23 = vector.extract_strided_slice %19 {offsets = [0, 32], sizes = [2, 32], strides = [1, 1]} : vector<2x96xf32> to vector<2x32xf32>
    %24 = vector.extract_strided_slice %19 {offsets = [0, 64], sizes = [2, 32], strides = [1, 1]} : vector<2x96xf32> to vector<2x32xf32>
    %25 = arith.mulf %23, %12 : vector<2x32xf32>
    %26 = arith.mulf %22, %21 : vector<2x32xf32>
    %27 = arith.addf %25, %26 : vector<2x32xf32>
    %28 = math.tanh %27 : vector<2x32xf32>
    %29 = arith.mulf %24, %28 : vector<2x32xf32>
    %c2 = arith.constant 2 : index
    %c0_20 = arith.constant 0 : index
    %30 = vector.load %arg9[%c2, %c0_20] : memref<16x128xf32, #tpu.memory_space<vmem>>, vector<2x128xf32>
    %cst_21 = arith.constant dense<0.000000e+00> : vector<2x128xf32>
    %31 = tpu.matmul %29, %8, %cst_21 {dimension_numbers = #tpu.dot_dimension_numbers<[1], [0], [0], [1], [0, 0, 1, 1], [], []>} : vector<2x32xf32>, vector<32x128xf32>, vector<2x128xf32> -> vector<2x128xf32>
    %32 = arith.addf %30, %31 : vector<2x128xf32>
    %cst_22 = arith.constant dense<0.000000e+00> : vector<2x128xf32>
    %33 = tpu.matmul %29, %9, %cst_22 {dimension_numbers = #tpu.dot_dimension_numbers<[1], [0], [0], [1], [0, 0, 1, 1], [], []>} : vector<2x32xf32>, vector<32x128xf32>, vector<2x128xf32> -> vector<2x128xf32>
    %cst_23 = arith.constant dense<0.000000e+00> : vector<2x128xf32>
    %34 = tpu.matmul %12, %10, %cst_23 {dimension_numbers = #tpu.dot_dimension_numbers<[1], [0], [0], [1], [0, 0, 1, 1], [], []>} : vector<2x32xf32>, vector<32x128xf32>, vector<2x128xf32> -> vector<2x128xf32>
    %35 = arith.addf %33, %34 : vector<2x128xf32>
    %36 = vector.broadcast %11 : vector<1x128xf32> to vector<2x128xf32>
    %37 = arith.addf %35, %36 : vector<2x128xf32>
    %38 = vector.extract_strided_slice %32 {offsets = [0, 0], sizes = [2, 96], strides = [1, 1]} : vector<2x128xf32> to vector<2x96xf32>
    %39 = arith.negf %38 : vector<2x96xf32>
    %40 = math.exp %39 : vector<2x96xf32>
    %cst_24 = arith.constant 1.000000e+00 : f32
    %41 = vector.broadcast %cst_24 : f32 to vector<2x96xf32>
    %42 = arith.addf %41, %40 : vector<2x96xf32>
    %43 = arith.divf %41, %42 : vector<2x96xf32>
    %44 = vector.extract_strided_slice %32 {offsets = [0, 96], sizes = [2, 32], strides = [1, 1]} : vector<2x128xf32> to vector<2x32xf32>
    %45 = math.tanh %44 : vector<2x32xf32>
    %46 = vector.extract_strided_slice %43 {offsets = [0, 0], sizes = [2, 32], strides = [1, 1]} : vector<2x96xf32> to vector<2x32xf32>
    %47 = vector.extract_strided_slice %43 {offsets = [0, 32], sizes = [2, 32], strides = [1, 1]} : vector<2x96xf32> to vector<2x32xf32>
    %48 = vector.extract_strided_slice %43 {offsets = [0, 64], sizes = [2, 32], strides = [1, 1]} : vector<2x96xf32> to vector<2x32xf32>
    %49 = arith.mulf %47, %27 : vector<2x32xf32>
    %50 = arith.mulf %46, %45 : vector<2x32xf32>
    %51 = arith.addf %49, %50 : vector<2x32xf32>
    %52 = math.tanh %51 : vector<2x32xf32>
    %53 = arith.mulf %48, %52 : vector<2x32xf32>
    %54 = vector.extract_strided_slice %37 {offsets = [0, 0], sizes = [2, 96], strides = [1, 1]} : vector<2x128xf32> to vector<2x96xf32>
    %55 = arith.negf %54 : vector<2x96xf32>
    %56 = math.exp %55 : vector<2x96xf32>
    %cst_25 = arith.constant 1.000000e+00 : f32
    %57 = vector.broadcast %cst_25 : f32 to vector<2x96xf32>
    %58 = arith.addf %57, %56 : vector<2x96xf32>
    %59 = arith.divf %57, %58 : vector<2x96xf32>
    %60 = vector.extract_strided_slice %37 {offsets = [0, 96], sizes = [2, 32], strides = [1, 1]} : vector<2x128xf32> to vector<2x32xf32>
    %61 = math.tanh %60 : vector<2x32xf32>
    %62 = vector.extract_strided_slice %59 {offsets = [0, 0], sizes = [2, 32], strides = [1, 1]} : vector<2x96xf32> to vector<2x32xf32>
    %63 = vector.extract_strided_slice %59 {offsets = [0, 32], sizes = [2, 32], strides = [1, 1]} : vector<2x96xf32> to vector<2x32xf32>
    %64 = vector.extract_strided_slice %59 {offsets = [0, 64], sizes = [2, 32], strides = [1, 1]} : vector<2x96xf32> to vector<2x32xf32>
    %65 = arith.mulf %63, %12 : vector<2x32xf32>
    %66 = arith.mulf %62, %61 : vector<2x32xf32>
    %67 = arith.addf %65, %66 : vector<2x32xf32>
    %68 = math.tanh %67 : vector<2x32xf32>
    %69 = arith.mulf %64, %68 : vector<2x32xf32>
    %c4 = arith.constant 4 : index
    %c0_26 = arith.constant 0 : index
    %70 = vector.load %arg9[%c4, %c0_26] : memref<16x128xf32, #tpu.memory_space<vmem>>, vector<2x128xf32>
    %cst_27 = arith.constant dense<0.000000e+00> : vector<2x128xf32>
    %71 = tpu.matmul %53, %8, %cst_27 {dimension_numbers = #tpu.dot_dimension_numbers<[1], [0], [0], [1], [0, 0, 1, 1], [], []>} : vector<2x32xf32>, vector<32x128xf32>, vector<2x128xf32> -> vector<2x128xf32>
    %72 = arith.addf %70, %71 : vector<2x128xf32>
    %cst_28 = arith.constant dense<0.000000e+00> : vector<2x128xf32>
    %73 = tpu.matmul %53, %9, %cst_28 {dimension_numbers = #tpu.dot_dimension_numbers<[1], [0], [0], [1], [0, 0, 1, 1], [], []>} : vector<2x32xf32>, vector<32x128xf32>, vector<2x128xf32> -> vector<2x128xf32>
    %cst_29 = arith.constant dense<0.000000e+00> : vector<2x128xf32>
    %74 = tpu.matmul %69, %10, %cst_29 {dimension_numbers = #tpu.dot_dimension_numbers<[1], [0], [0], [1], [0, 0, 1, 1], [], []>} : vector<2x32xf32>, vector<32x128xf32>, vector<2x128xf32> -> vector<2x128xf32>
    %75 = arith.addf %73, %74 : vector<2x128xf32>
    %76 = vector.broadcast %11 : vector<1x128xf32> to vector<2x128xf32>
    %77 = arith.addf %75, %76 : vector<2x128xf32>
    %78 = vector.extract_strided_slice %72 {offsets = [0, 0], sizes = [2, 96], strides = [1, 1]} : vector<2x128xf32> to vector<2x96xf32>
    %79 = arith.negf %78 : vector<2x96xf32>
    %80 = math.exp %79 : vector<2x96xf32>
    %cst_30 = arith.constant 1.000000e+00 : f32
    %81 = vector.broadcast %cst_30 : f32 to vector<2x96xf32>
    %82 = arith.addf %81, %80 : vector<2x96xf32>
    %83 = arith.divf %81, %82 : vector<2x96xf32>
    %84 = vector.extract_strided_slice %72 {offsets = [0, 96], sizes = [2, 32], strides = [1, 1]} : vector<2x128xf32> to vector<2x32xf32>
    %85 = math.tanh %84 : vector<2x32xf32>
    %86 = vector.extract_strided_slice %83 {offsets = [0, 0], sizes = [2, 32], strides = [1, 1]} : vector<2x96xf32> to vector<2x32xf32>
    %87 = vector.extract_strided_slice %83 {offsets = [0, 32], sizes = [2, 32], strides = [1, 1]} : vector<2x96xf32> to vector<2x32xf32>
    %88 = vector.extract_strided_slice %83 {offsets = [0, 64], sizes = [2, 32], strides = [1, 1]} : vector<2x96xf32> to vector<2x32xf32>
    %89 = arith.mulf %87, %51 : vector<2x32xf32>
    %90 = arith.mulf %86, %85 : vector<2x32xf32>
    %91 = arith.addf %89, %90 : vector<2x32xf32>
    %92 = math.tanh %91 : vector<2x32xf32>
    %93 = arith.mulf %88, %92 : vector<2x32xf32>
    %94 = vector.extract_strided_slice %77 {offsets = [0, 0], sizes = [2, 96], strides = [1, 1]} : vector<2x128xf32> to vector<2x96xf32>
    %95 = arith.negf %94 : vector<2x96xf32>
    %96 = math.exp %95 : vector<2x96xf32>
    %cst_31 = arith.constant 1.000000e+00 : f32
    %97 = vector.broadcast %cst_31 : f32 to vector<2x96xf32>
    %98 = arith.addf %97, %96 : vector<2x96xf32>
    %99 = arith.divf %97, %98 : vector<2x96xf32>
    %100 = vector.extract_strided_slice %77 {offsets = [0, 96], sizes = [2, 32], strides = [1, 1]} : vector<2x128xf32> to vector<2x32xf32>
    %101 = math.tanh %100 : vector<2x32xf32>
    %102 = vector.extract_strided_slice %99 {offsets = [0, 0], sizes = [2, 32], strides = [1, 1]} : vector<2x96xf32> to vector<2x32xf32>
    %103 = vector.extract_strided_slice %99 {offsets = [0, 32], sizes = [2, 32], strides = [1, 1]} : vector<2x96xf32> to vector<2x32xf32>
    %104 = vector.extract_strided_slice %99 {offsets = [0, 64], sizes = [2, 32], strides = [1, 1]} : vector<2x96xf32> to vector<2x32xf32>
    %105 = arith.mulf %103, %67 : vector<2x32xf32>
    %106 = arith.mulf %102, %101 : vector<2x32xf32>
    %107 = arith.addf %105, %106 : vector<2x32xf32>
    %108 = math.tanh %107 : vector<2x32xf32>
    %109 = arith.mulf %104, %108 : vector<2x32xf32>
    %c6 = arith.constant 6 : index
    %c0_32 = arith.constant 0 : index
    %110 = vector.load %arg9[%c6, %c0_32] : memref<16x128xf32, #tpu.memory_space<vmem>>, vector<2x128xf32>
    %cst_33 = arith.constant dense<0.000000e+00> : vector<2x128xf32>
    %111 = tpu.matmul %93, %8, %cst_33 {dimension_numbers = #tpu.dot_dimension_numbers<[1], [0], [0], [1], [0, 0, 1, 1], [], []>} : vector<2x32xf32>, vector<32x128xf32>, vector<2x128xf32> -> vector<2x128xf32>
    %112 = arith.addf %110, %111 : vector<2x128xf32>
    %cst_34 = arith.constant dense<0.000000e+00> : vector<2x128xf32>
    %113 = tpu.matmul %93, %9, %cst_34 {dimension_numbers = #tpu.dot_dimension_numbers<[1], [0], [0], [1], [0, 0, 1, 1], [], []>} : vector<2x32xf32>, vector<32x128xf32>, vector<2x128xf32> -> vector<2x128xf32>
    %cst_35 = arith.constant dense<0.000000e+00> : vector<2x128xf32>
    %114 = tpu.matmul %109, %10, %cst_35 {dimension_numbers = #tpu.dot_dimension_numbers<[1], [0], [0], [1], [0, 0, 1, 1], [], []>} : vector<2x32xf32>, vector<32x128xf32>, vector<2x128xf32> -> vector<2x128xf32>
    %115 = arith.addf %113, %114 : vector<2x128xf32>
    %116 = vector.broadcast %11 : vector<1x128xf32> to vector<2x128xf32>
    %117 = arith.addf %115, %116 : vector<2x128xf32>
    %118 = vector.extract_strided_slice %112 {offsets = [0, 0], sizes = [2, 96], strides = [1, 1]} : vector<2x128xf32> to vector<2x96xf32>
    %119 = arith.negf %118 : vector<2x96xf32>
    %120 = math.exp %119 : vector<2x96xf32>
    %cst_36 = arith.constant 1.000000e+00 : f32
    %121 = vector.broadcast %cst_36 : f32 to vector<2x96xf32>
    %122 = arith.addf %121, %120 : vector<2x96xf32>
    %123 = arith.divf %121, %122 : vector<2x96xf32>
    %124 = vector.extract_strided_slice %112 {offsets = [0, 96], sizes = [2, 32], strides = [1, 1]} : vector<2x128xf32> to vector<2x32xf32>
    %125 = math.tanh %124 : vector<2x32xf32>
    %126 = vector.extract_strided_slice %123 {offsets = [0, 0], sizes = [2, 32], strides = [1, 1]} : vector<2x96xf32> to vector<2x32xf32>
    %127 = vector.extract_strided_slice %123 {offsets = [0, 32], sizes = [2, 32], strides = [1, 1]} : vector<2x96xf32> to vector<2x32xf32>
    %128 = vector.extract_strided_slice %123 {offsets = [0, 64], sizes = [2, 32], strides = [1, 1]} : vector<2x96xf32> to vector<2x32xf32>
    %129 = arith.mulf %127, %91 : vector<2x32xf32>
    %130 = arith.mulf %126, %125 : vector<2x32xf32>
    %131 = arith.addf %129, %130 : vector<2x32xf32>
    %132 = math.tanh %131 : vector<2x32xf32>
    %133 = arith.mulf %128, %132 : vector<2x32xf32>
    %134 = vector.extract_strided_slice %117 {offsets = [0, 0], sizes = [2, 96], strides = [1, 1]} : vector<2x128xf32> to vector<2x96xf32>
    %135 = arith.negf %134 : vector<2x96xf32>
    %136 = math.exp %135 : vector<2x96xf32>
    %cst_37 = arith.constant 1.000000e+00 : f32
    %137 = vector.broadcast %cst_37 : f32 to vector<2x96xf32>
    %138 = arith.addf %137, %136 : vector<2x96xf32>
    %139 = arith.divf %137, %138 : vector<2x96xf32>
    %140 = vector.extract_strided_slice %117 {offsets = [0, 96], sizes = [2, 32], strides = [1, 1]} : vector<2x128xf32> to vector<2x32xf32>
    %141 = math.tanh %140 : vector<2x32xf32>
    %142 = vector.extract_strided_slice %139 {offsets = [0, 0], sizes = [2, 32], strides = [1, 1]} : vector<2x96xf32> to vector<2x32xf32>
    %143 = vector.extract_strided_slice %139 {offsets = [0, 32], sizes = [2, 32], strides = [1, 1]} : vector<2x96xf32> to vector<2x32xf32>
    %144 = vector.extract_strided_slice %139 {offsets = [0, 64], sizes = [2, 32], strides = [1, 1]} : vector<2x96xf32> to vector<2x32xf32>
    %145 = arith.mulf %143, %107 : vector<2x32xf32>
    %146 = arith.mulf %142, %141 : vector<2x32xf32>
    %147 = arith.addf %145, %146 : vector<2x32xf32>
    %148 = math.tanh %147 : vector<2x32xf32>
    %149 = arith.mulf %144, %148 : vector<2x32xf32>
    %c8 = arith.constant 8 : index
    %c0_38 = arith.constant 0 : index
    %150 = vector.load %arg9[%c8, %c0_38] : memref<16x128xf32, #tpu.memory_space<vmem>>, vector<2x128xf32>
    %cst_39 = arith.constant dense<0.000000e+00> : vector<2x128xf32>
    %151 = tpu.matmul %133, %8, %cst_39 {dimension_numbers = #tpu.dot_dimension_numbers<[1], [0], [0], [1], [0, 0, 1, 1], [], []>} : vector<2x32xf32>, vector<32x128xf32>, vector<2x128xf32> -> vector<2x128xf32>
    %152 = arith.addf %150, %151 : vector<2x128xf32>
    %cst_40 = arith.constant dense<0.000000e+00> : vector<2x128xf32>
    %153 = tpu.matmul %133, %9, %cst_40 {dimension_numbers = #tpu.dot_dimension_numbers<[1], [0], [0], [1], [0, 0, 1, 1], [], []>} : vector<2x32xf32>, vector<32x128xf32>, vector<2x128xf32> -> vector<2x128xf32>
    %cst_41 = arith.constant dense<0.000000e+00> : vector<2x128xf32>
    %154 = tpu.matmul %149, %10, %cst_41 {dimension_numbers = #tpu.dot_dimension_numbers<[1], [0], [0], [1], [0, 0, 1, 1], [], []>} : vector<2x32xf32>, vector<32x128xf32>, vector<2x128xf32> -> vector<2x128xf32>
    %155 = arith.addf %153, %154 : vector<2x128xf32>
    %156 = vector.broadcast %11 : vector<1x128xf32> to vector<2x128xf32>
    %157 = arith.addf %155, %156 : vector<2x128xf32>
    %158 = vector.extract_strided_slice %152 {offsets = [0, 0], sizes = [2, 96], strides = [1, 1]} : vector<2x128xf32> to vector<2x96xf32>
    %159 = arith.negf %158 : vector<2x96xf32>
    %160 = math.exp %159 : vector<2x96xf32>
    %cst_42 = arith.constant 1.000000e+00 : f32
    %161 = vector.broadcast %cst_42 : f32 to vector<2x96xf32>
    %162 = arith.addf %161, %160 : vector<2x96xf32>
    %163 = arith.divf %161, %162 : vector<2x96xf32>
    %164 = vector.extract_strided_slice %152 {offsets = [0, 96], sizes = [2, 32], strides = [1, 1]} : vector<2x128xf32> to vector<2x32xf32>
    %165 = math.tanh %164 : vector<2x32xf32>
    %166 = vector.extract_strided_slice %163 {offsets = [0, 0], sizes = [2, 32], strides = [1, 1]} : vector<2x96xf32> to vector<2x32xf32>
    %167 = vector.extract_strided_slice %163 {offsets = [0, 32], sizes = [2, 32], strides = [1, 1]} : vector<2x96xf32> to vector<2x32xf32>
    %168 = vector.extract_strided_slice %163 {offsets = [0, 64], sizes = [2, 32], strides = [1, 1]} : vector<2x96xf32> to vector<2x32xf32>
    %169 = arith.mulf %167, %131 : vector<2x32xf32>
    %170 = arith.mulf %166, %165 : vector<2x32xf32>
    %171 = arith.addf %169, %170 : vector<2x32xf32>
    %172 = math.tanh %171 : vector<2x32xf32>
    %173 = arith.mulf %168, %172 : vector<2x32xf32>
    %174 = vector.extract_strided_slice %157 {offsets = [0, 0], sizes = [2, 96], strides = [1, 1]} : vector<2x128xf32> to vector<2x96xf32>
    %175 = arith.negf %174 : vector<2x96xf32>
    %176 = math.exp %175 : vector<2x96xf32>
    %cst_43 = arith.constant 1.000000e+00 : f32
    %177 = vector.broadcast %cst_43 : f32 to vector<2x96xf32>
    %178 = arith.addf %177, %176 : vector<2x96xf32>
    %179 = arith.divf %177, %178 : vector<2x96xf32>
    %180 = vector.extract_strided_slice %157 {offsets = [0, 96], sizes = [2, 32], strides = [1, 1]} : vector<2x128xf32> to vector<2x32xf32>
    %181 = math.tanh %180 : vector<2x32xf32>
    %182 = vector.extract_strided_slice %179 {offsets = [0, 0], sizes = [2, 32], strides = [1, 1]} : vector<2x96xf32> to vector<2x32xf32>
    %183 = vector.extract_strided_slice %179 {offsets = [0, 32], sizes = [2, 32], strides = [1, 1]} : vector<2x96xf32> to vector<2x32xf32>
    %184 = vector.extract_strided_slice %179 {offsets = [0, 64], sizes = [2, 32], strides = [1, 1]} : vector<2x96xf32> to vector<2x32xf32>
    %185 = arith.mulf %183, %147 : vector<2x32xf32>
    %186 = arith.mulf %182, %181 : vector<2x32xf32>
    %187 = arith.addf %185, %186 : vector<2x32xf32>
    %188 = math.tanh %187 : vector<2x32xf32>
    %189 = arith.mulf %184, %188 : vector<2x32xf32>
    %c10 = arith.constant 10 : index
    %c0_44 = arith.constant 0 : index
    %190 = vector.load %arg9[%c10, %c0_44] : memref<16x128xf32, #tpu.memory_space<vmem>>, vector<2x128xf32>
    %cst_45 = arith.constant dense<0.000000e+00> : vector<2x128xf32>
    %191 = tpu.matmul %173, %8, %cst_45 {dimension_numbers = #tpu.dot_dimension_numbers<[1], [0], [0], [1], [0, 0, 1, 1], [], []>} : vector<2x32xf32>, vector<32x128xf32>, vector<2x128xf32> -> vector<2x128xf32>
    %192 = arith.addf %190, %191 : vector<2x128xf32>
    %cst_46 = arith.constant dense<0.000000e+00> : vector<2x128xf32>
    %193 = tpu.matmul %173, %9, %cst_46 {dimension_numbers = #tpu.dot_dimension_numbers<[1], [0], [0], [1], [0, 0, 1, 1], [], []>} : vector<2x32xf32>, vector<32x128xf32>, vector<2x128xf32> -> vector<2x128xf32>
    %cst_47 = arith.constant dense<0.000000e+00> : vector<2x128xf32>
    %194 = tpu.matmul %189, %10, %cst_47 {dimension_numbers = #tpu.dot_dimension_numbers<[1], [0], [0], [1], [0, 0, 1, 1], [], []>} : vector<2x32xf32>, vector<32x128xf32>, vector<2x128xf32> -> vector<2x128xf32>
    %195 = arith.addf %193, %194 : vector<2x128xf32>
    %196 = vector.broadcast %11 : vector<1x128xf32> to vector<2x128xf32>
    %197 = arith.addf %195, %196 : vector<2x128xf32>
    %198 = vector.extract_strided_slice %192 {offsets = [0, 0], sizes = [2, 96], strides = [1, 1]} : vector<2x128xf32> to vector<2x96xf32>
    %199 = arith.negf %198 : vector<2x96xf32>
    %200 = math.exp %199 : vector<2x96xf32>
    %cst_48 = arith.constant 1.000000e+00 : f32
    %201 = vector.broadcast %cst_48 : f32 to vector<2x96xf32>
    %202 = arith.addf %201, %200 : vector<2x96xf32>
    %203 = arith.divf %201, %202 : vector<2x96xf32>
    %204 = vector.extract_strided_slice %192 {offsets = [0, 96], sizes = [2, 32], strides = [1, 1]} : vector<2x128xf32> to vector<2x32xf32>
    %205 = math.tanh %204 : vector<2x32xf32>
    %206 = vector.extract_strided_slice %203 {offsets = [0, 0], sizes = [2, 32], strides = [1, 1]} : vector<2x96xf32> to vector<2x32xf32>
    %207 = vector.extract_strided_slice %203 {offsets = [0, 32], sizes = [2, 32], strides = [1, 1]} : vector<2x96xf32> to vector<2x32xf32>
    %208 = vector.extract_strided_slice %203 {offsets = [0, 64], sizes = [2, 32], strides = [1, 1]} : vector<2x96xf32> to vector<2x32xf32>
    %209 = arith.mulf %207, %171 : vector<2x32xf32>
    %210 = arith.mulf %206, %205 : vector<2x32xf32>
    %211 = arith.addf %209, %210 : vector<2x32xf32>
    %212 = math.tanh %211 : vector<2x32xf32>
    %213 = arith.mulf %208, %212 : vector<2x32xf32>
    %214 = vector.extract_strided_slice %197 {offsets = [0, 0], sizes = [2, 96], strides = [1, 1]} : vector<2x128xf32> to vector<2x96xf32>
    %215 = arith.negf %214 : vector<2x96xf32>
    %216 = math.exp %215 : vector<2x96xf32>
    %cst_49 = arith.constant 1.000000e+00 : f32
    %217 = vector.broadcast %cst_49 : f32 to vector<2x96xf32>
    %218 = arith.addf %217, %216 : vector<2x96xf32>
    %219 = arith.divf %217, %218 : vector<2x96xf32>
    %220 = vector.extract_strided_slice %197 {offsets = [0, 96], sizes = [2, 32], strides = [1, 1]} : vector<2x128xf32> to vector<2x32xf32>
    %221 = math.tanh %220 : vector<2x32xf32>
    %222 = vector.extract_strided_slice %219 {offsets = [0, 0], sizes = [2, 32], strides = [1, 1]} : vector<2x96xf32> to vector<2x32xf32>
    %223 = vector.extract_strided_slice %219 {offsets = [0, 32], sizes = [2, 32], strides = [1, 1]} : vector<2x96xf32> to vector<2x32xf32>
    %224 = vector.extract_strided_slice %219 {offsets = [0, 64], sizes = [2, 32], strides = [1, 1]} : vector<2x96xf32> to vector<2x32xf32>
    %225 = arith.mulf %223, %187 : vector<2x32xf32>
    %226 = arith.mulf %222, %221 : vector<2x32xf32>
    %227 = arith.addf %225, %226 : vector<2x32xf32>
    %228 = math.tanh %227 : vector<2x32xf32>
    %229 = arith.mulf %224, %228 : vector<2x32xf32>
    %c12 = arith.constant 12 : index
    %c0_50 = arith.constant 0 : index
    %230 = vector.load %arg9[%c12, %c0_50] : memref<16x128xf32, #tpu.memory_space<vmem>>, vector<2x128xf32>
    %cst_51 = arith.constant dense<0.000000e+00> : vector<2x128xf32>
    %231 = tpu.matmul %213, %8, %cst_51 {dimension_numbers = #tpu.dot_dimension_numbers<[1], [0], [0], [1], [0, 0, 1, 1], [], []>} : vector<2x32xf32>, vector<32x128xf32>, vector<2x128xf32> -> vector<2x128xf32>
    %232 = arith.addf %230, %231 : vector<2x128xf32>
    %cst_52 = arith.constant dense<0.000000e+00> : vector<2x128xf32>
    %233 = tpu.matmul %213, %9, %cst_52 {dimension_numbers = #tpu.dot_dimension_numbers<[1], [0], [0], [1], [0, 0, 1, 1], [], []>} : vector<2x32xf32>, vector<32x128xf32>, vector<2x128xf32> -> vector<2x128xf32>
    %cst_53 = arith.constant dense<0.000000e+00> : vector<2x128xf32>
    %234 = tpu.matmul %229, %10, %cst_53 {dimension_numbers = #tpu.dot_dimension_numbers<[1], [0], [0], [1], [0, 0, 1, 1], [], []>} : vector<2x32xf32>, vector<32x128xf32>, vector<2x128xf32> -> vector<2x128xf32>
    %235 = arith.addf %233, %234 : vector<2x128xf32>
    %236 = vector.broadcast %11 : vector<1x128xf32> to vector<2x128xf32>
    %237 = arith.addf %235, %236 : vector<2x128xf32>
    %238 = vector.extract_strided_slice %232 {offsets = [0, 0], sizes = [2, 96], strides = [1, 1]} : vector<2x128xf32> to vector<2x96xf32>
    %239 = arith.negf %238 : vector<2x96xf32>
    %240 = math.exp %239 : vector<2x96xf32>
    %cst_54 = arith.constant 1.000000e+00 : f32
    %241 = vector.broadcast %cst_54 : f32 to vector<2x96xf32>
    %242 = arith.addf %241, %240 : vector<2x96xf32>
    %243 = arith.divf %241, %242 : vector<2x96xf32>
    %244 = vector.extract_strided_slice %232 {offsets = [0, 96], sizes = [2, 32], strides = [1, 1]} : vector<2x128xf32> to vector<2x32xf32>
    %245 = math.tanh %244 : vector<2x32xf32>
    %246 = vector.extract_strided_slice %243 {offsets = [0, 0], sizes = [2, 32], strides = [1, 1]} : vector<2x96xf32> to vector<2x32xf32>
    %247 = vector.extract_strided_slice %243 {offsets = [0, 32], sizes = [2, 32], strides = [1, 1]} : vector<2x96xf32> to vector<2x32xf32>
    %248 = vector.extract_strided_slice %243 {offsets = [0, 64], sizes = [2, 32], strides = [1, 1]} : vector<2x96xf32> to vector<2x32xf32>
    %249 = arith.mulf %247, %211 : vector<2x32xf32>
    %250 = arith.mulf %246, %245 : vector<2x32xf32>
    %251 = arith.addf %249, %250 : vector<2x32xf32>
    %252 = math.tanh %251 : vector<2x32xf32>
    %253 = arith.mulf %248, %252 : vector<2x32xf32>
    %254 = vector.extract_strided_slice %237 {offsets = [0, 0], sizes = [2, 96], strides = [1, 1]} : vector<2x128xf32> to vector<2x96xf32>
    %255 = arith.negf %254 : vector<2x96xf32>
    %256 = math.exp %255 : vector<2x96xf32>
    %cst_55 = arith.constant 1.000000e+00 : f32
    %257 = vector.broadcast %cst_55 : f32 to vector<2x96xf32>
    %258 = arith.addf %257, %256 : vector<2x96xf32>
    %259 = arith.divf %257, %258 : vector<2x96xf32>
    %260 = vector.extract_strided_slice %237 {offsets = [0, 96], sizes = [2, 32], strides = [1, 1]} : vector<2x128xf32> to vector<2x32xf32>
    %261 = math.tanh %260 : vector<2x32xf32>
    %262 = vector.extract_strided_slice %259 {offsets = [0, 0], sizes = [2, 32], strides = [1, 1]} : vector<2x96xf32> to vector<2x32xf32>
    %263 = vector.extract_strided_slice %259 {offsets = [0, 32], sizes = [2, 32], strides = [1, 1]} : vector<2x96xf32> to vector<2x32xf32>
    %264 = vector.extract_strided_slice %259 {offsets = [0, 64], sizes = [2, 32], strides = [1, 1]} : vector<2x96xf32> to vector<2x32xf32>
    %265 = arith.mulf %263, %227 : vector<2x32xf32>
    %266 = arith.mulf %262, %261 : vector<2x32xf32>
    %267 = arith.addf %265, %266 : vector<2x32xf32>
    %268 = math.tanh %267 : vector<2x32xf32>
    %269 = arith.mulf %264, %268 : vector<2x32xf32>
    %c14 = arith.constant 14 : index
    %c0_56 = arith.constant 0 : index
    %270 = vector.load %arg9[%c14, %c0_56] : memref<16x128xf32, #tpu.memory_space<vmem>>, vector<2x128xf32>
    %cst_57 = arith.constant dense<0.000000e+00> : vector<2x128xf32>
    %271 = tpu.matmul %253, %8, %cst_57 {dimension_numbers = #tpu.dot_dimension_numbers<[1], [0], [0], [1], [0, 0, 1, 1], [], []>} : vector<2x32xf32>, vector<32x128xf32>, vector<2x128xf32> -> vector<2x128xf32>
    %272 = arith.addf %270, %271 : vector<2x128xf32>
    %cst_58 = arith.constant dense<0.000000e+00> : vector<2x128xf32>
    %273 = tpu.matmul %253, %9, %cst_58 {dimension_numbers = #tpu.dot_dimension_numbers<[1], [0], [0], [1], [0, 0, 1, 1], [], []>} : vector<2x32xf32>, vector<32x128xf32>, vector<2x128xf32> -> vector<2x128xf32>
    %cst_59 = arith.constant dense<0.000000e+00> : vector<2x128xf32>
    %274 = tpu.matmul %269, %10, %cst_59 {dimension_numbers = #tpu.dot_dimension_numbers<[1], [0], [0], [1], [0, 0, 1, 1], [], []>} : vector<2x32xf32>, vector<32x128xf32>, vector<2x128xf32> -> vector<2x128xf32>
    %275 = arith.addf %273, %274 : vector<2x128xf32>
    %276 = vector.broadcast %11 : vector<1x128xf32> to vector<2x128xf32>
    %277 = arith.addf %275, %276 : vector<2x128xf32>
    %278 = vector.extract_strided_slice %272 {offsets = [0, 0], sizes = [2, 96], strides = [1, 1]} : vector<2x128xf32> to vector<2x96xf32>
    %279 = arith.negf %278 : vector<2x96xf32>
    %280 = math.exp %279 : vector<2x96xf32>
    %cst_60 = arith.constant 1.000000e+00 : f32
    %281 = vector.broadcast %cst_60 : f32 to vector<2x96xf32>
    %282 = arith.addf %281, %280 : vector<2x96xf32>
    %283 = arith.divf %281, %282 : vector<2x96xf32>
    %284 = vector.extract_strided_slice %272 {offsets = [0, 96], sizes = [2, 32], strides = [1, 1]} : vector<2x128xf32> to vector<2x32xf32>
    %285 = math.tanh %284 : vector<2x32xf32>
    %286 = vector.extract_strided_slice %283 {offsets = [0, 0], sizes = [2, 32], strides = [1, 1]} : vector<2x96xf32> to vector<2x32xf32>
    %287 = vector.extract_strided_slice %283 {offsets = [0, 32], sizes = [2, 32], strides = [1, 1]} : vector<2x96xf32> to vector<2x32xf32>
    %288 = vector.extract_strided_slice %283 {offsets = [0, 64], sizes = [2, 32], strides = [1, 1]} : vector<2x96xf32> to vector<2x32xf32>
    %289 = arith.mulf %287, %251 : vector<2x32xf32>
    %290 = arith.mulf %286, %285 : vector<2x32xf32>
    %291 = arith.addf %289, %290 : vector<2x32xf32>
    %292 = math.tanh %291 : vector<2x32xf32>
    %293 = arith.mulf %288, %292 : vector<2x32xf32>
    %294 = vector.extract_strided_slice %277 {offsets = [0, 0], sizes = [2, 96], strides = [1, 1]} : vector<2x128xf32> to vector<2x96xf32>
    %295 = arith.negf %294 : vector<2x96xf32>
    %296 = math.exp %295 : vector<2x96xf32>
    %cst_61 = arith.constant 1.000000e+00 : f32
    %297 = vector.broadcast %cst_61 : f32 to vector<2x96xf32>
    %298 = arith.addf %297, %296 : vector<2x96xf32>
    %299 = arith.divf %297, %298 : vector<2x96xf32>
    %300 = vector.extract_strided_slice %277 {offsets = [0, 96], sizes = [2, 32], strides = [1, 1]} : vector<2x128xf32> to vector<2x32xf32>
    %301 = math.tanh %300 : vector<2x32xf32>
    %302 = vector.extract_strided_slice %299 {offsets = [0, 0], sizes = [2, 32], strides = [1, 1]} : vector<2x96xf32> to vector<2x32xf32>
    %303 = vector.extract_strided_slice %299 {offsets = [0, 32], sizes = [2, 32], strides = [1, 1]} : vector<2x96xf32> to vector<2x32xf32>
    %304 = vector.extract_strided_slice %299 {offsets = [0, 64], sizes = [2, 32], strides = [1, 1]} : vector<2x96xf32> to vector<2x32xf32>
    %305 = arith.mulf %303, %267 : vector<2x32xf32>
    %306 = arith.mulf %302, %301 : vector<2x32xf32>
    %307 = arith.addf %305, %306 : vector<2x32xf32>
    %308 = math.tanh %307 : vector<2x32xf32>
    %309 = arith.mulf %304, %308 : vector<2x32xf32>
    %cst_62 = arith.constant dense<0.000000e+00> : vector<2x128xf32>
    %310 = tpu.matmul %293, %9, %cst_62 {dimension_numbers = #tpu.dot_dimension_numbers<[1], [0], [0], [1], [0, 0, 1, 1], [], []>} : vector<2x32xf32>, vector<32x128xf32>, vector<2x128xf32> -> vector<2x128xf32>
    %cst_63 = arith.constant dense<0.000000e+00> : vector<2x128xf32>
    %311 = tpu.matmul %309, %10, %cst_63 {dimension_numbers = #tpu.dot_dimension_numbers<[1], [0], [0], [1], [0, 0, 1, 1], [], []>} : vector<2x32xf32>, vector<32x128xf32>, vector<2x128xf32> -> vector<2x128xf32>
    %312 = arith.addf %310, %311 : vector<2x128xf32>
    %313 = vector.broadcast %11 : vector<1x128xf32> to vector<2x128xf32>
    %314 = arith.addf %312, %313 : vector<2x128xf32>
    %315 = vector.extract_strided_slice %314 {offsets = [0, 0], sizes = [2, 96], strides = [1, 1]} : vector<2x128xf32> to vector<2x96xf32>
    %316 = arith.negf %315 : vector<2x96xf32>
    %317 = math.exp %316 : vector<2x96xf32>
    %cst_64 = arith.constant 1.000000e+00 : f32
    %318 = vector.broadcast %cst_64 : f32 to vector<2x96xf32>
    %319 = arith.addf %318, %317 : vector<2x96xf32>
    %320 = arith.divf %318, %319 : vector<2x96xf32>
    %321 = vector.extract_strided_slice %314 {offsets = [0, 96], sizes = [2, 32], strides = [1, 1]} : vector<2x128xf32> to vector<2x32xf32>
    %322 = math.tanh %321 : vector<2x32xf32>
    %323 = vector.extract_strided_slice %320 {offsets = [0, 0], sizes = [2, 32], strides = [1, 1]} : vector<2x96xf32> to vector<2x32xf32>
    %324 = vector.extract_strided_slice %320 {offsets = [0, 32], sizes = [2, 32], strides = [1, 1]} : vector<2x96xf32> to vector<2x32xf32>
    %325 = vector.extract_strided_slice %320 {offsets = [0, 64], sizes = [2, 32], strides = [1, 1]} : vector<2x96xf32> to vector<2x32xf32>
    %326 = arith.mulf %324, %307 : vector<2x32xf32>
    %327 = arith.mulf %323, %322 : vector<2x32xf32>
    %328 = arith.addf %326, %327 : vector<2x32xf32>
    %329 = math.tanh %328 : vector<2x32xf32>
    %330 = arith.mulf %325, %329 : vector<2x32xf32>
    %c0_65 = arith.constant 0 : index
    %c0_66 = arith.constant 0 : index
    %c0_67 = arith.constant 0 : index
    %331 = vector.load %arg8[%c0_65, %c0_66, %c0_67] : memref<1x2x32xf32, #tpu.memory_space<vmem>>, vector<1x2x32xf32>
    %332 = vector.shape_cast %331 : vector<1x2x32xf32> to vector<2x32xf32>
    %333 = vector.shape_cast %330 : vector<2x32xf32> to vector<1x2x32xf32>
    tpu.vector_store %arg8[%c0_65, %c0_66, %c0_67], %333 {strides = array<i32>} : memref<1x2x32xf32, #tpu.memory_space<vmem>>, vector<1x2x32xf32>,
    return
  }
  func.func @transform_0(%arg0: i32) -> (i32, i32, i32) {
    %c0_i32 = arith.constant 0 : i32
    %c0_i32_0 = arith.constant 0 : i32
    %c0_i32_1 = arith.constant 0 : i32
    return %arg0, %c0_i32, %c0_i32_0 : i32, i32, i32
  }
  func.func @transform_1(%arg0: i32) -> (i32, i32) {
    %c0_i32 = arith.constant 0 : i32
    %c0_i32_0 = arith.constant 0 : i32
    %c0_i32_1 = arith.constant 0 : i32
    return %c0_i32, %c0_i32_0 : i32, i32
  }
  func.func @transform_2(%arg0: i32) -> (i32, i32) {
    %c0_i32 = arith.constant 0 : i32
    %c0_i32_0 = arith.constant 0 : i32
    %c0_i32_1 = arith.constant 0 : i32
    return %c0_i32, %c0_i32_0 : i32, i32
  }
  func.func @transform_3(%arg0: i32) -> (i32, i32) {
    %c0_i32 = arith.constant 0 : i32
    %c0_i32_0 = arith.constant 0 : i32
    %c0_i32_1 = arith.constant 0 : i32
    return %c0_i32, %c0_i32_0 : i32, i32
  }
  func.func @transform_4(%arg0: i32) -> (i32, i32) {
    %c0_i32 = arith.constant 0 : i32
    %c0_i32_0 = arith.constant 0 : i32
    %c0_i32_1 = arith.constant 0 : i32
    return %c0_i32, %c0_i32_0 : i32, i32
  }
  func.func @transform_5(%arg0: i32) -> (i32, i32) {
    %c0_i32 = arith.constant 0 : i32
    %c0_i32_0 = arith.constant 0 : i32
    %c0_i32_1 = arith.constant 0 : i32
    return %c0_i32, %c0_i32_0 : i32, i32
  }
  func.func @transform_6(%arg0: i32) -> (i32, i32) {
    %c0_i32 = arith.constant 0 : i32
    %c0_i32_0 = arith.constant 0 : i32
    %c0_i32_1 = arith.constant 0 : i32
    return %c0_i32, %c0_i32_0 : i32, i32
  }
  func.func @transform_7(%arg0: i32) -> (i32, i32, i32) {
    %c0_i32 = arith.constant 0 : i32
    %c0_i32_0 = arith.constant 0 : i32
    %c0_i32_1 = arith.constant 0 : i32
    return %arg0, %c0_i32, %c0_i32_0 : i32, i32, i32
  }
}

</mosaic_0001>

<llo_original>
// kernel: _lambda_.1
$region0: #{_lambda_.1}
  #allocation0 [shape = 'u32[]', space=smem, size = 0x4, offset = 0x4, fixed_abs, tag = 'smem constant byte address 0x4 - core index']
  #allocation1 [shape = 'u32[144,128]{1,0:T(1,128)}', space=vmem, size = 0x12000, scoped, tag = 'internal scratch']
  #allocation2 [shape = 'f32[16,128]{1,0:T(8,128)}', space=vmem, size = 0x2000, scoped, tag = 'scratch operand']
  %s0 = inlined_call_operand.vmem [shape: f32[1,16,16], index: 0, kind: input, shape index: {}]
  %s1 = inlined_call_operand.vmem [shape: f32[16,128], index: 1, kind: input, shape index: {}]
  %s2 = inlined_call_operand.vmem [shape: f32[32,128], index: 2, kind: input, shape index: {}]
  %s3 = inlined_call_operand.vmem [shape: f32[1,128], index: 3, kind: input, shape index: {}]
  %s4 = inlined_call_operand.vmem [shape: f32[32,128], index: 4, kind: input, shape index: {}]
  %s5 = inlined_call_operand.vmem [shape: f32[32,128], index: 5, kind: input, shape index: {}]
  %s6 = inlined_call_operand.vmem [shape: f32[1,128], index: 6, kind: input, shape index: {}]
  %s7 = inlined_call_operand.hbm [shape: f32[1,2,32], index: 7, kind: output, shape index: {}]
  %s8 = sld [smem:[#allocation0]]
  $region38: #{_lambda_.1} parent=0
    _
  %s10 = ssub.s32 1, %s8
  %s11 = scalar_select 0, %s10, %s8
  $region1: #{_lambda_.1} parent=0
    #allocation3 [shape = 'u8[1024]{0}', space=vmem, size = 0x400, scoped, tag = 'output window, operand 0, single buffered']
    #allocation4 [shape = 's32[1]{0}', space=sflag, size = 0x4, scoped, tag = 'scoped memory for _lambda_.1']
    %12 = vsyncpa [#allocation4], 0
    // Predicated region
    $region2: #{_lambda_.1} parent=1 // pred_check
      _
    $region3: #{_lambda_.1} parent=1 // pred_check_branch
      %14 = sbr.rel (0) target = $region5
    $region4: #{_lambda_.1} parent=1 // pred_region
      _
    $region5: #{_lambda_.1} parent=1 // pred_fallthru
      _
    // Predicated region
    $region6: #{_lambda_.1} parent=1 // pred_check
      _
    $region7: #{_lambda_.1} parent=1 // pred_check_branch
      %16 = sbr.rel (0) target = $region9
    $region8: #{_lambda_.1} parent=1 // pred_region
      _
    $region9: #{_lambda_.1} parent=1 // pred_fallthru
      _
    // Predicated region
    $region10: #{_lambda_.1} parent=1 // pred_check
      _
    $region11: #{_lambda_.1} parent=1 // pred_check_branch
      %18 = sbr.rel (0) target = $region13
    $region12: #{_lambda_.1} parent=1 // pred_region
      _
    $region13: #{_lambda_.1} parent=1 // pred_fallthru
      _
    // Predicated region
    $region14: #{_lambda_.1} parent=1 // pred_check
      _
    $region15: #{_lambda_.1} parent=1 // pred_check_branch
      %20 = sbr.rel (0) target = $region17
    $region16: #{_lambda_.1} parent=1 // pred_region
      _
    $region17: #{_lambda_.1} parent=1 // pred_fallthru
      _
    // Predicated region
    $region18: #{_lambda_.1} parent=1 // pred_check
      _
    $region19: #{_lambda_.1} parent=1 // pred_check_branch
      %22 = sbr.rel (0) target = $region21
    $region20: #{_lambda_.1} parent=1 // pred_region
      _
    $region21: #{_lambda_.1} parent=1 // pred_fallthru
      _
    // Predicated region
    $region22: #{_lambda_.1} parent=1 // pred_check
      _
    $region23: #{_lambda_.1} parent=1 // pred_check_branch
      %24 = sbr.rel (0) target = $region25
    $region24: #{_lambda_.1} parent=1 // pred_region
      _
    $region25: #{_lambda_.1} parent=1 // pred_fallthru
      _
    // Predicated region
    $region26: #{_lambda_.1} parent=1 // pred_check
      _
    $region27: #{_lambda_.1} parent=1 // pred_check_branch
      %26 = sbr.rel (0) target = $region29
    $region28: #{_lambda_.1} parent=1 // pred_region
      _
    $region29: #{_lambda_.1} parent=1 // pred_fallthru
      _
    %v27 = vld [vmem:[%s0] sm:$0xff]
    %v28 = vld [vmem:[%s0 + $0x8] sm:$0xff]
    %v29 = vld [vmem:[%s1] sm:$0xff]
    %v30 = vld [vmem:[%s1 + $0x8] sm:$0xff]
    %v31 = vld [vmem:[%s3] sm:$0x1]
    %v33 = vlaneseq
    %v34 = vshrl.u32 %v33, 7
    %v35 = vsub.s32 0, %v34
    %v36 = vrot.slane %v31, %v35
    %vm38 = vcmask 130048
    %v40 = vsel %vm38, %v27, 0
    %v43 = vsel %vm38, %v28, 0
    %45 = vmatprep.subr.mxu0 0.0
    %46 = vmatpush1.msra.mxu0 %v29
    %47 = vmatprep.subr.mxu0 0.0
    %48 = vmatpush1.msra.mxu0 %v30
    %49 = vmatprep.subr.mxu0 0.0
    %50 = vmatpush1.msra.mxu0 0.0
    %51 = vmatprep.subr.mxu0 0.0
    %52 = vmatpush1.msra.mxu0 0.0
    %53 = vmatprep.subr.mxu0 0.0
    %54 = vmatpush1.msra.mxu0 0.0
    %55 = vmatprep.subr.mxu0 0.0
    %56 = vmatpush1.msra.mxu0 0.0
    %57 = vmatprep.subr.mxu0 0.0
    %58 = vmatpush1.msra.mxu0 0.0
    %59 = vmatprep.subr.mxu0 0.0
    %60 = vmatpush1.msra.mxu0 0.0
    %61 = vmatprep.subr.mxu0 0.0
    %62 = vmatpush1.msra.mxu0 0.0
    %63 = vmatprep.subr.mxu0 0.0
    %64 = vmatpush1.msra.mxu0 0.0
    %65 = vmatprep.subr.mxu0 0.0
    %66 = vmatpush1.msra.mxu0 0.0
    %67 = vmatprep.subr.mxu0 0.0
    %68 = vmatpush1.msra.mxu0 0.0
    %69 = vmatprep.subr.mxu0 0.0
    %70 = vmatpush1.msra.mxu0 0.0
    %71 = vmatprep.subr.mxu0 0.0
    %72 = vmatpush1.msra.mxu0 0.0
    %73 = vmatprep.subr.mxu0 0.0
    %74 = vmatpush1.msra.mxu0 0.0
    %75 = vmatprep.subr.mxu0 0.0
    %76 = vmatpush1.msra.mxu0 0.0
    %77 = vmatprep.subr.mxu0 0.0
    %78 = vmatpush1.msra.mxu0 0.0
    %79 = vmatprep.subr.mxu0 0.0
    %80 = vmatpush1.msra.mxu0 0.0
    %81 = vmatprep.subr.mxu0 0.0
    %82 = vmatpush1.msra.mxu0 0.0
    %83 = vmatprep.subr.mxu0 0.0
    %84 = vmatpush1.msra.mxu0 0.0
    %85 = vmatprep.subr.mxu0 0.0
    %86 = vmatpush1.msra.mxu0 0.0
    %87 = vmatprep.subr.mxu0 0.0
    %88 = vmatpush1.msra.mxu0 0.0
    %89 = vmatprep.subr.mxu0 0.0
    %90 = vmatpush1.msra.mxu0 0.0
    %91 = vmatprep.subr.mxu0 0.0
    %92 = vmatpush1.msra.mxu0 0.0
    %93 = vmatprep.subr.mxu0 0.0
    %94 = vmatpush1.msra.mxu0 0.0
    %95 = vmatprep.subr.mxu0 0.0
    %96 = vmatpush1.msra.mxu0 0.0
    %97 = vmatprep.subr.mxu0 0.0
    %98 = vmatpush1.msra.mxu0 0.0
    %99 = vmatprep.subr.mxu0 0.0
    %100 = vmatpush1.msra.mxu0 0.0
    %101 = vmatprep.subr.mxu0 0.0
    %102 = vmatpush1.msra.mxu0 0.0
    %103 = vmatprep.subr.mxu0 0.0
    %104 = vmatpush1.msra.mxu0 0.0
    %105 = vmatprep.subr.mxu0 0.0
    %106 = vmatpush1.msra.mxu0 0.0
    %107 = vmatprep.subr.mxu0 0.0
    %108 = vmatpush1.msra.mxu0 0.0
    %109 = vmatprep.mubr.f32.mxu0 0.0
    %110 = vmatmul.mubr.f32.gmra.mrb[0].mxu0 %v40
    %v111 = vpop.f32.mrb[0].mxu0
    %v112 = vadd.f32 %v36, %v111
    %v113 = vpop.f32.mrb[0].mxu0
    %114 = vmatprep.mubr.f32.mxu0 0.0
    %115 = vmatmul.mubr.f32.gmra.mrb[0].mxu0 %v43
    %v116 = vpop.f32.mrb[0].mxu0
    %v117 = vadd.f32 %v36, %v116
    %v118 = vpop.f32.mrb[0].mxu0
    %119 = vdwg.mxu0
    %120 = vst [vmem:[#allocation2] sm:$0xff] %v112
    %121 = vst [vmem:[#allocation2 + $0x8] sm:$0xff] %v117
    %v122 = vld [vmem:[%s2] sm:$0xff]
    %v123 = vld [vmem:[%s2 + $0x8] sm:$0xff]
    %v124 = vld [vmem:[%s2 + $0x10] sm:$0xff]
    %v125 = vld [vmem:[%s2 + $0x18] sm:$0xff]
    %v126 = vld [vmem:[%s4] sm:$0xff]
    %v127 = vld [vmem:[%s4 + $0x8] sm:$0xff]
    %v128 = vld [vmem:[%s4 + $0x10] sm:$0xff]
    %v129 = vld [vmem:[%s4 + $0x18] sm:$0xff]
    %v130 = vld [vmem:[%s5] sm:$0xff]
    %v131 = vld [vmem:[%s5 + $0x8] sm:$0xff]
    %v132 = vld [vmem:[%s5 + $0x10] sm:$0xff]
    %v133 = vld [vmem:[%s5 + $0x18] sm:$0xff]
    %v134 = vld [vmem:[%s6] sm:$0x1]
    %v135 = vld [vmem:[#allocation2] sm:$0x3]
    %v136 = vxor.u32 %v135, 2147483648
    %v137 = vmul.f32 %v136, 1.442695
    %v138 = vpow.pop %v137
    %v139 = vadd.f32 %v138, 1.0
    %v140 = vrcp.pop %v139
    %v141 = vmul.f32 1.0, %v140
    %v142 = vtanh.pop %v135
    %v143 = vmul.f32 %v141, 0.0
    %145 = vrot.lane.b32.xlu0 %v142, 32
    %v146 = vpop.permute.xlu0 %145
    %v148 = vmul.f32 %v141, %v146
    %150 = vrot.lane.b32.xlu0 %v148, 32
    %v151 = vpop.permute.xlu0 %150
    %v153 = vadd.f32 %v143, %v151
    %v154 = vtanh.pop %v153
    %156 = vrot.lane.b32.xlu0 %v154, 32
    %v157 = vpop.permute.xlu0 %156
    %v159 = vmul.f32 %v141, %v157
    %v160 = vld [vmem:[#allocation2 + $0x2] sm:$0x3]
    %162 = vrot.lane.b32.xlu0 %v159, 64
    %v163 = vpop.permute.xlu0 %162
    %vm164 = vcmask 261120
    %v165 = vsel %vm164, %v163, 0
    %167 = vmatprep.subr.mxu0 0.0
    %168 = vmatpush1.msra.mxu0 %v122
    %169 = vmatprep.subr.mxu0 0.0
    %170 = vmatpush1.msra.mxu0 %v123
    %171 = vmatprep.subr.mxu0 0.0
    %172 = vmatpush1.msra.mxu0 %v124
    %173 = vmatprep.subr.mxu0 0.0
    %174 = vmatpush1.msra.mxu0 %v125
    %175 = vmatprep.subr.mxu0 0.0
    %176 = vmatpush1.msra.mxu0 0.0
    %177 = vmatprep.subr.mxu0 0.0
    %178 = vmatpush1.msra.mxu0 0.0
    %179 = vmatprep.subr.mxu0 0.0
    %180 = vmatpush1.msra.mxu0 0.0
    %181 = vmatprep.subr.mxu0 0.0
    %182 = vmatpush1.msra.mxu0 0.0
    %183 = vmatprep.subr.mxu0 0.0
    %184 = vmatpush1.msra.mxu0 0.0
    %185 = vmatprep.subr.mxu0 0.0
    %186 = vmatpush1.msra.mxu0 0.0
    %187 = vmatprep.subr.mxu0 0.0
    %188 = vmatpush1.msra.mxu0 0.0
    %189 = vmatprep.subr.mxu0 0.0
    %190 = vmatpush1.msra.mxu0 0.0
    %191 = vmatprep.subr.mxu0 0.0
    %192 = vmatpush1.msra.mxu0 0.0
    %193 = vmatprep.subr.mxu0 0.0
    %194 = vmatpush1.msra.mxu0 0.0
    %195 = vmatprep.subr.mxu0 0.0
    %196 = vmatpush1.msra.mxu0 0.0
    %197 = vmatprep.subr.mxu0 0.0
    %198 = vmatpush1.msra.mxu0 0.0
    %199 = vmatprep.subr.mxu0 0.0
    %200 = vmatpush1.msra.mxu0 0.0
    %201 = vmatprep.subr.mxu0 0.0
    %202 = vmatpush1.msra.mxu0 0.0
    %203 = vmatprep.subr.mxu0 0.0
    %204 = vmatpush1.msra.mxu0 0.0
    %205 = vmatprep.subr.mxu0 0.0
    %206 = vmatpush1.msra.mxu0 0.0
    %207 = vmatprep.subr.mxu0 0.0
    %208 = vmatpush1.msra.mxu0 0.0
    %209 = vmatprep.subr.mxu0 0.0
    %210 = vmatpush1.msra.mxu0 0.0
    %211 = vmatprep.subr.mxu0 0.0
    %212 = vmatpush1.msra.mxu0 0.0
    %213 = vmatprep.subr.mxu0 0.0
    %214 = vmatpush1.msra.mxu0 0.0
    %215 = vmatprep.subr.mxu0 0.0
    %216 = vmatpush1.msra.mxu0 0.0
    %217 = vmatprep.subr.mxu0 0.0
    %218 = vmatpush1.msra.mxu0 0.0
    %219 = vmatprep.subr.mxu0 0.0
    %220 = vmatpush1.msra.mxu0 0.0
    %221 = vmatprep.subr.mxu0 0.0
    %222 = vmatpush1.msra.mxu0 0.0
    %223 = vmatprep.subr.mxu0 0.0
    %224 = vmatpush1.msra.mxu0 0.0
    %225 = vmatprep.subr.mxu0 0.0
    %226 = vmatpush1.msra.mxu0 0.0
    %227 = vmatprep.subr.mxu0 0.0
    %228 = vmatpush1.msra.mxu0 0.0
    %229 = vmatprep.subr.mxu0 0.0
    %230 = vmatpush1.msra.mxu0 0.0
    %231 = vmatprep.mubr.f32.mxu0 0.0
    %232 = vmatmul.mubr.f32.gmra.mrb[0].mxu0 %v165
    %v233 = vpop.f32.mrb[0].mxu0
    %v234 = vadd.f32 0.0, %v233
    %v235 = vpop.f32.mrb[0].mxu0
    %236 = vdwg.mxu0
    %v237 = vadd.f32 %v160, %v234
    %v239 = vsel %vm164, 0.0, 0
    %241 = vmatprep.subr.mxu0 0.0
    %242 = vmatpush1.msra.mxu0 %v130
    %243 = vmatprep.subr.mxu0 0.0
    %244 = vmatpush1.msra.mxu0 %v131
    %245 = vmatprep.subr.mxu0 0.0
    %246 = vmatpush1.msra.mxu0 %v132
    %247 = vmatprep.subr.mxu0 0.0
    %248 = vmatpush1.msra.mxu0 %v133
    %249 = vmatprep.subr.mxu0 0.0
    %250 = vmatpush1.msra.mxu0 0.0
    %251 = vmatprep.subr.mxu0 0.0
    %252 = vmatpush1.msra.mxu0 0.0
    %253 = vmatprep.subr.mxu0 0.0
    %254 = vmatpush1.msra.mxu0 0.0
    %255 = vmatprep.subr.mxu0 0.0
    %256 = vmatpush1.msra.mxu0 0.0
    %257 = vmatprep.subr.mxu0 0.0
    %258 = vmatpush1.msra.mxu0 0.0
    %259 = vmatprep.subr.mxu0 0.0
    %260 = vmatpush1.msra.mxu0 0.0
    %261 = vmatprep.subr.mxu0 0.0
    %262 = vmatpush1.msra.mxu0 0.0
    %263 = vmatprep.subr.mxu0 0.0
    %264 = vmatpush1.msra.mxu0 0.0
    %265 = vmatprep.subr.mxu0 0.0
    %266 = vmatpush1.msra.mxu0 0.0
    %267 = vmatprep.subr.mxu0 0.0
    %268 = vmatpush1.msra.mxu0 0.0
    %269 = vmatprep.subr.mxu0 0.0
    %270 = vmatpush1.msra.mxu0 0.0
    %271 = vmatprep.subr.mxu0 0.0
    %272 = vmatpush1.msra.mxu0 0.0
    %273 = vmatprep.subr.mxu0 0.0
    %274 = vmatpush1.msra.mxu0 0.0
    %275 = vmatprep.subr.mxu0 0.0
    %276 = vmatpush1.msra.mxu0 0.0
    %277 = vmatprep.subr.mxu0 0.0
    %278 = vmatpush1.msra.mxu0 0.0
    %279 = vmatprep.subr.mxu0 0.0
    %280 = vmatpush1.msra.mxu0 0.0
    %281 = vmatprep.subr.mxu0 0.0
    %282 = vmatpush1.msra.mxu0 0.0
    %283 = vmatprep.subr.mxu0 0.0
    %284 = vmatpush1.msra.mxu0 0.0
    %285 = vmatprep.subr.mxu0 0.0
    %286 = vmatpush1.msra.mxu0 0.0
    %287 = vmatprep.subr.mxu0 0.0
    %288 = vmatpush1.msra.mxu0 0.0
    %289 = vmatprep.subr.mxu0 0.0
    %290 = vmatpush1.msra.mxu0 0.0
    %291 = vmatprep.subr.mxu0 0.0
    %292 = vmatpush1.msra.mxu0 0.0
    %293 = vmatprep.subr.mxu0 0.0
    %294 = vmatpush1.msra.mxu0 0.0
    %295 = vmatprep.subr.mxu0 0.0
    %296 = vmatpush1.msra.mxu0 0.0
    %297 = vmatprep.subr.mxu0 0.0
    %298 = vmatpush1.msra.mxu0 0.0
    %299 = vmatprep.subr.mxu0 0.0
    %300 = vmatpush1.msra.mxu0 0.0
    %301 = vmatprep.subr.mxu0 0.0
    %302 = vmatpush1.msra.mxu0 0.0
    %303 = vmatprep.subr.mxu0 0.0
    %304 = vmatpush1.msra.mxu0 0.0
    %305 = vmatprep.mubr.f32.mxu0 0.0
    %306 = vmatmul.mubr.f32.gmra.mrb[0].mxu0 %v239
    %v307 = vpop.f32.mrb[0].mxu0
    %v308 = vadd.f32 0.0, %v307
    %v309 = vpop.f32.mrb[0].mxu0
    %310 = vdwg.mxu0
    %311 = vmatprep.subr.mxu0 0.0
    %312 = vmatpush1.msra.mxu0 %v126
    %313 = vmatprep.subr.mxu0 0.0
    %314 = vmatpush1.msra.mxu0 %v127
    %315 = vmatprep.subr.mxu0 0.0
    %316 = vmatpush1.msra.mxu0 %v128
    %317 = vmatprep.subr.mxu0 0.0
    %318 = vmatpush1.msra.mxu0 %v129
    %319 = vmatprep.subr.mxu0 0.0
    %320 = vmatpush1.msra.mxu0 0.0
    %321 = vmatprep.subr.mxu0 0.0
    %322 = vmatpush1.msra.mxu0 0.0
    %323 = vmatprep.subr.mxu0 0.0
    %324 = vmatpush1.msra.mxu0 0.0
    %325 = vmatprep.subr.mxu0 0.0
    %326 = vmatpush1.msra.mxu0 0.0
    %327 = vmatprep.subr.mxu0 0.0
    %328 = vmatpush1.msra.mxu0 0.0
    %329 = vmatprep.subr.mxu0 0.0
    %330 = vmatpush1.msra.mxu0 0.0
    %331 = vmatprep.subr.mxu0 0.0
    %332 = vmatpush1.msra.mxu0 0.0
    %333 = vmatprep.subr.mxu0 0.0
    %334 = vmatpush1.msra.mxu0 0.0
    %335 = vmatprep.subr.mxu0 0.0
    %336 = vmatpush1.msra.mxu0 0.0
    %337 = vmatprep.subr.mxu0 0.0
    %338 = vmatpush1.msra.mxu0 0.0
    %339 = vmatprep.subr.mxu0 0.0
    %340 = vmatpush1.msra.mxu0 0.0
    %341 = vmatprep.subr.mxu0 0.0
    %342 = vmatpush1.msra.mxu0 0.0
    %343 = vmatprep.subr.mxu0 0.0
    %344 = vmatpush1.msra.mxu0 0.0
    %345 = vmatprep.subr.mxu0 0.0
    %346 = vmatpush1.msra.mxu0 0.0
    %347 = vmatprep.subr.mxu0 0.0
    %348 = vmatpush1.msra.mxu0 0.0
    %349 = vmatprep.subr.mxu0 0.0
    %350 = vmatpush1.msra.mxu0 0.0
    %351 = vmatprep.subr.mxu0 0.0
    %352 = vmatpush1.msra.mxu0 0.0
    %353 = vmatprep.subr.mxu0 0.0
    %354 = vmatpush1.msra.mxu0 0.0
    %355 = vmatprep.subr.mxu0 0.0
    %356 = vmatpush1.msra.mxu0 0.0
    %357 = vmatprep.subr.mxu0 0.0
    %358 = vmatpush1.msra.mxu0 0.0
    %359 = vmatprep.subr.mxu0 0.0
    %360 = vmatpush1.msra.mxu0 0.0
    %361 = vmatprep.subr.mxu0 0.0
    %362 = vmatpush1.msra.mxu0 0.0
    %363 = vmatprep.subr.mxu0 0.0
    %364 = vmatpush1.msra.mxu0 0.0
    %365 = vmatprep.subr.mxu0 0.0
    %366 = vmatpush1.msra.mxu0 0.0
    %367 = vmatprep.subr.mxu0 0.0
    %368 = vmatpush1.msra.mxu0 0.0
    %369 = vmatprep.subr.mxu0 0.0
    %370 = vmatpush1.msra.mxu0 0.0
    %371 = vmatprep.subr.mxu0 0.0
    %372 = vmatpush1.msra.mxu0 0.0
    %373 = vmatprep.subr.mxu0 0.0
    %374 = vmatpush1.msra.mxu0 0.0
    %375 = vmatprep.mubr.f32.mxu0 0.0
    %376 = vmatmul.mubr.f32.gmra.mrb[0].mxu0 %v165
    %v377 = vpop.f32.mrb[0].mxu0
    %v378 = vadd.f32 %v308, %v377
    %v379 = vpop.f32.mrb[0].mxu0
    %380 = vdwg.mxu0
    %v382 = vlaneseq
    %v383 = vshrl.u32 %v382, 7
    %v384 = vsub.s32 0, %v383
    %v385 = vrot.slane %v134, %v384
    %v387 = vadd.f32 %v378, %v385
    %v388 = vxor.u32 %v237, 2147483648
    %v389 = vmul.f32 %v388, 1.442695
    %v390 = vpow.pop %v389
    %v391 = vadd.f32 %v390, 1.0
    %v392 = vrcp.pop %v391
    %v393 = vmul.f32 1.0, %v392
    %v394 = vtanh.pop %v237
    %v395 = vmul.f32 %v393, %v153
    %397 = vrot.lane.b32.xlu0 %v394, 32
    %v398 = vpop.permute.xlu0 %397
    %v400 = vmul.f32 %v393, %v398
    %402 = vrot.lane.b32.xlu0 %v400, 32
    %v403 = vpop.permute.xlu0 %402
    %v405 = vadd.f32 %v395, %v403
    %v406 = vtanh.pop %v405
    %408 = vrot.lane.b32.xlu0 %v406, 32
    %v409 = vpop.permute.xlu0 %408
    %v411 = vmul.f32 %v393, %v409
    %v412 = vxor.u32 %v387, 2147483648
    %v413 = vmul.f32 %v412, 1.442695
    %v414 = vpow.pop %v413
    %v415 = vadd.f32 %v414, 1.0
    %v416 = vrcp.pop %v415
    %v417 = vmul.f32 1.0, %v416
    %v418 = vtanh.pop %v387
    %v419 = vmul.f32 %v417, 0.0
    %421 = vrot.lane.b32.xlu0 %v418, 32
    %v422 = vpop.permute.xlu0 %421
    %v424 = vmul.f32 %v417, %v422
    %426 = vrot.lane.b32.xlu0 %v424, 32
    %v427 = vpop.permute.xlu0 %426
    %v429 = vadd.f32 %v419, %v427
    %v430 = vtanh.pop %v429
    %432 = vrot.lane.b32.xlu0 %v430, 32
    %v433 = vpop.permute.xlu0 %432
    %v435 = vmul.f32 %v417, %v433
    %v436 = vld [vmem:[#allocation2 + $0x4] sm:$0x3]
    %438 = vrot.lane.b32.xlu0 %v411, 64
    %v439 = vpop.permute.xlu0 %438
    %v440 = vsel %vm164, %v439, 0
    %442 = vmatprep.subr.mxu0 0.0
    %443 = vmatpush1.msra.mxu0 %v122
    %444 = vmatprep.subr.mxu0 0.0
    %445 = vmatpush1.msra.mxu0 %v123
    %446 = vmatprep.subr.mxu0 0.0
    %447 = vmatpush1.msra.mxu0 %v124
    %448 = vmatprep.subr.mxu0 0.0
    %449 = vmatpush1.msra.mxu0 %v125
    %450 = vmatprep.subr.mxu0 0.0
    %451 = vmatpush1.msra.mxu0 0.0
    %452 = vmatprep.subr.mxu0 0.0
    %453 = vmatpush1.msra.mxu0 0.0
    %454 = vmatprep.subr.mxu0 0.0
    %455 = vmatpush1.msra.mxu0 0.0
    %456 = vmatprep.subr.mxu0 0.0
    %457 = vmatpush1.msra.mxu0 0.0
    %458 = vmatprep.subr.mxu0 0.0
    %459 = vmatpush1.msra.mxu0 0.0
    %460 = vmatprep.subr.mxu0 0.0
    %461 = vmatpush1.msra.mxu0 0.0
    %462 = vmatprep.subr.mxu0 0.0
    %463 = vmatpush1.msra.mxu0 0.0
    %464 = vmatprep.subr.mxu0 0.0
    %465 = vmatpush1.msra.mxu0 0.0
    %466 = vmatprep.subr.mxu0 0.0
    %467 = vmatpush1.msra.mxu0 0.0
    %468 = vmatprep.subr.mxu0 0.0
    %469 = vmatpush1.msra.mxu0 0.0
    %470 = vmatprep.subr.mxu0 0.0
    %471 = vmatpush1.msra.mxu0 0.0
    %472 = vmatprep.subr.mxu0 0.0
    %473 = vmatpush1.msra.mxu0 0.0
    %474 = vmatprep.subr.mxu0 0.0
    %475 = vmatpush1.msra.mxu0 0.0
    %476 = vmatprep.subr.mxu0 0.0
    %477 = vmatpush1.msra.mxu0 0.0
    %478 = vmatprep.subr.mxu0 0.0
    %479 = vmatpush1.msra.mxu0 0.0
    %480 = vmatprep.subr.mxu0 0.0
    %481 = vmatpush1.msra.mxu0 0.0
    %482 = vmatprep.subr.mxu0 0.0
    %483 = vmatpush1.msra.mxu0 0.0
    %484 = vmatprep.subr.mxu0 0.0
    %485 = vmatpush1.msra.mxu0 0.0
    %486 = vmatprep.subr.mxu0 0.0
    %487 = vmatpush1.msra.mxu0 0.0
    %488 = vmatprep.subr.mxu0 0.0
    %489 = vmatpush1.msra.mxu0 0.0
    %490 = vmatprep.subr.mxu0 0.0
    %491 = vmatpush1.msra.mxu0 0.0
    %492 = vmatprep.subr.mxu0 0.0
    %493 = vmatpush1.msra.mxu0 0.0
    %494 = vmatprep.subr.mxu0 0.0
    %495 = vmatpush1.msra.mxu0 0.0
    %496 = vmatprep.subr.mxu0 0.0
    %497 = vmatpush1.msra.mxu0 0.0
    %498 = vmatprep.subr.mxu0 0.0
    %499 = vmatpush1.msra.mxu0 0.0
    %500 = vmatprep.subr.mxu0 0.0
    %501 = vmatpush1.msra.mxu0 0.0
    %502 = vmatprep.subr.mxu0 0.0
    %503 = vmatpush1.msra.mxu0 0.0
    %504 = vmatprep.subr.mxu0 0.0
    %505 = vmatpush1.msra.mxu0 0.0
    %506 = vmatprep.mubr.f32.mxu0 0.0
    %507 = vmatmul.mubr.f32.gmra.mrb[0].mxu0 %v440
    %v508 = vpop.f32.mrb[0].mxu0
    %v509 = vadd.f32 0.0, %v508
    %v510 = vpop.f32.mrb[0].mxu0
    %511 = vdwg.mxu0
    %v512 = vadd.f32 %v436, %v509
    %514 = vrot.lane.b32.xlu0 %v435, 64
    %v515 = vpop.permute.xlu0 %514
    %v516 = vsel %vm164, %v515, 0
    %518 = vmatprep.subr.mxu0 0.0
    %519 = vmatpush1.msra.mxu0 %v130
    %520 = vmatprep.subr.mxu0 0.0
    %521 = vmatpush1.msra.mxu0 %v131
    %522 = vmatprep.subr.mxu0 0.0
    %523 = vmatpush1.msra.mxu0 %v132
    %524 = vmatprep.subr.mxu0 0.0
    %525 = vmatpush1.msra.mxu0 %v133
    %526 = vmatprep.subr.mxu0 0.0
    %527 = vmatpush1.msra.mxu0 0.0
    %528 = vmatprep.subr.mxu0 0.0
    %529 = vmatpush1.msra.mxu0 0.0
    %530 = vmatprep.subr.mxu0 0.0
    %531 = vmatpush1.msra.mxu0 0.0
    %532 = vmatprep.subr.mxu0 0.0
    %533 = vmatpush1.msra.mxu0 0.0
    %534 = vmatprep.subr.mxu0 0.0
    %535 = vmatpush1.msra.mxu0 0.0
    %536 = vmatprep.subr.mxu0 0.0
    %537 = vmatpush1.msra.mxu0 0.0
    %538 = vmatprep.subr.mxu0 0.0
    %539 = vmatpush1.msra.mxu0 0.0
    %540 = vmatprep.subr.mxu0 0.0
    %541 = vmatpush1.msra.mxu0 0.0
    %542 = vmatprep.subr.mxu0 0.0
    %543 = vmatpush1.msra.mxu0 0.0
    %544 = vmatprep.subr.mxu0 0.0
    %545 = vmatpush1.msra.mxu0 0.0
    %546 = vmatprep.subr.mxu0 0.0
    %547 = vmatpush1.msra.mxu0 0.0
    %548 = vmatprep.subr.mxu0 0.0
    %549 = vmatpush1.msra.mxu0 0.0
    %550 = vmatprep.subr.mxu0 0.0
    %551 = vmatpush1.msra.mxu0 0.0
    %552 = vmatprep.subr.mxu0 0.0
    %553 = vmatpush1.msra.mxu0 0.0
    %554 = vmatprep.subr.mxu0 0.0
    %555 = vmatpush1.msra.mxu0 0.0
    %556 = vmatprep.subr.mxu0 0.0
    %557 = vmatpush1.msra.mxu0 0.0
    %558 = vmatprep.subr.mxu0 0.0
    %559 = vmatpush1.msra.mxu0 0.0
    %560 = vmatprep.subr.mxu0 0.0
    %561 = vmatpush1.msra.mxu0 0.0
    %562 = vmatprep.subr.mxu0 0.0
    %563 = vmatpush1.msra.mxu0 0.0
    %564 = vmatprep.subr.mxu0 0.0
    %565 = vmatpush1.msra.mxu0 0.0
    %566 = vmatprep.subr.mxu0 0.0
    %567 = vmatpush1.msra.mxu0 0.0
    %568 = vmatprep.subr.mxu0 0.0
    %569 = vmatpush1.msra.mxu0 0.0
    %570 = vmatprep.subr.mxu0 0.0
    %571 = vmatpush1.msra.mxu0 0.0
    %572 = vmatprep.subr.mxu0 0.0
    %573 = vmatpush1.msra.mxu0 0.0
    %574 = vmatprep.subr.mxu0 0.0
    %575 = vmatpush1.msra.mxu0 0.0
    %576 = vmatprep.subr.mxu0 0.0
    %577 = vmatpush1.msra.mxu0 0.0
    %578 = vmatprep.subr.mxu0 0.0
    %579 = vmatpush1.msra.mxu0 0.0
    %580 = vmatprep.subr.mxu0 0.0
    %581 = vmatpush1.msra.mxu0 0.0
    %582 = vmatprep.mubr.f32.mxu0 0.0
    %583 = vmatmul.mubr.f32.gmra.mrb[0].mxu0 %v516
    %v584 = vpop.f32.mrb[0].mxu0
    %v585 = vadd.f32 0.0, %v584
    %v586 = vpop.f32.mrb[0].mxu0
    %587 = vdwg.mxu0
    %588 = vmatprep.subr.mxu0 0.0
    %589 = vmatpush1.msra.mxu0 %v126
    %590 = vmatprep.subr.mxu0 0.0
    %591 = vmatpush1.msra.mxu0 %v127
    %592 = vmatprep.subr.mxu0 0.0
    %593 = vmatpush1.msra.mxu0 %v128
    %594 = vmatprep.subr.mxu0 0.0
    %595 = vmatpush1.msra.mxu0 %v129
    %596 = vmatprep.subr.mxu0 0.0
    %597 = vmatpush1.msra.mxu0 0.0
    %598 = vmatprep.subr.mxu0 0.0
    %599 = vmatpush1.msra.mxu0 0.0
    %600 = vmatprep.subr.mxu0 0.0
    %601 = vmatpush1.msra.mxu0 0.0
    %602 = vmatprep.subr.mxu0 0.0
    %603 = vmatpush1.msra.mxu0 0.0
    %604 = vmatprep.subr.mxu0 0.0
    %605 = vmatpush1.msra.mxu0 0.0
    %606 = vmatprep.subr.mxu0 0.0
    %607 = vmatpush1.msra.mxu0 0.0
    %608 = vmatprep.subr.mxu0 0.0
    %609 = vmatpush1.msra.mxu0 0.0
    %610 = vmatprep.subr.mxu0 0.0
    %611 = vmatpush1.msra.mxu0 0.0
    %612 = vmatprep.subr.mxu0 0.0
    %613 = vmatpush1.msra.mxu0 0.0
    %614 = vmatprep.subr.mxu0 0.0
    %615 = vmatpush1.msra.mxu0 0.0
    %616 = vmatprep.subr.mxu0 0.0
    %617 = vmatpush1.msra.mxu0 0.0
    %618 = vmatprep.subr.mxu0 0.0
    %619 = vmatpush1.msra.mxu0 0.0
    %620 = vmatprep.subr.mxu0 0.0
    %621 = vmatpush1.msra.mxu0 0.0
    %622 = vmatprep.subr.mxu0 0.0
    %623 = vmatpush1.msra.mxu0 0.0
    %624 = vmatprep.subr.mxu0 0.0
    %625 = vmatpush1.msra.mxu0 0.0
    %626 = vmatprep.subr.mxu0 0.0
    %627 = vmatpush1.msra.mxu0 0.0
    %628 = vmatprep.subr.mxu0 0.0
    %629 = vmatpush1.msra.mxu0 0.0
    %630 = vmatprep.subr.mxu0 0.0
    %631 = vmatpush1.msra.mxu0 0.0
    %632 = vmatprep.subr.mxu0 0.0
    %633 = vmatpush1.msra.mxu0 0.0
    %634 = vmatprep.subr.mxu0 0.0
    %635 = vmatpush1.msra.mxu0 0.0
    %636 = vmatprep.subr.mxu0 0.0
    %637 = vmatpush1.msra.mxu0 0.0
    %638 = vmatprep.subr.mxu0 0.0
    %639 = vmatpush1.msra.mxu0 0.0
    %640 = vmatprep.subr.mxu0 0.0
    %641 = vmatpush1.msra.mxu0 0.0
    %642 = vmatprep.subr.mxu0 0.0
    %643 = vmatpush1.msra.mxu0 0.0
    %644 = vmatprep.subr.mxu0 0.0
    %645 = vmatpush1.msra.mxu0 0.0
    %646 = vmatprep.subr.mxu0 0.0
    %647 = vmatpush1.msra.mxu0 0.0
    %648 = vmatprep.subr.mxu0 0.0
    %649 = vmatpush1.msra.mxu0 0.0
    %650 = vmatprep.subr.mxu0 0.0
    %651 = vmatpush1.msra.mxu0 0.0
    %652 = vmatprep.mubr.f32.mxu0 0.0
    %653 = vmatmul.mubr.f32.gmra.mrb[0].mxu0 %v440
    %v654 = vpop.f32.mrb[0].mxu0
    %v655 = vadd.f32 %v585, %v654
    %v656 = vpop.f32.mrb[0].mxu0
    %657 = vdwg.mxu0
    %v658 = vadd.f32 %v655, %v385
    %v659 = vxor.u32 %v512, 2147483648
    %v660 = vmul.f32 %v659, 1.442695
    %v661 = vpow.pop %v660
    %v662 = vadd.f32 %v661, 1.0
    %v663 = vrcp.pop %v662
    %v664 = vmul.f32 1.0, %v663
    %v665 = vtanh.pop %v512
    %v666 = vmul.f32 %v664, %v405
    %668 = vrot.lane.b32.xlu0 %v665, 32
    %v669 = vpop.permute.xlu0 %668
    %v671 = vmul.f32 %v664, %v669
    %673 = vrot.lane.b32.xlu0 %v671, 32
    %v674 = vpop.permute.xlu0 %673
    %v676 = vadd.f32 %v666, %v674
    %v677 = vtanh.pop %v676
    %679 = vrot.lane.b32.xlu0 %v677, 32
    %v680 = vpop.permute.xlu0 %679
    %v682 = vmul.f32 %v664, %v680
    %v683 = vxor.u32 %v658, 2147483648
    %v684 = vmul.f32 %v683, 1.442695
    %v685 = vpow.pop %v684
    %v686 = vadd.f32 %v685, 1.0
    %v687 = vrcp.pop %v686
    %v688 = vmul.f32 1.0, %v687
    %v689 = vtanh.pop %v658
    %v690 = vmul.f32 %v688, %v429
    %692 = vrot.lane.b32.xlu0 %v689, 32
    %v693 = vpop.permute.xlu0 %692
    %v695 = vmul.f32 %v688, %v693
    %697 = vrot.lane.b32.xlu0 %v695, 32
    %v698 = vpop.permute.xlu0 %697
    %v700 = vadd.f32 %v690, %v698
    %v701 = vtanh.pop %v700
    %703 = vrot.lane.b32.xlu0 %v701, 32
    %v704 = vpop.permute.xlu0 %703
    %v706 = vmul.f32 %v688, %v704
    %v707 = vld [vmem:[#allocation2 + $0x6] sm:$0x3]
    %709 = vrot.lane.b32.xlu0 %v682, 64
    %v710 = vpop.permute.xlu0 %709
    %v711 = vsel %vm164, %v710, 0
    %713 = vmatprep.subr.mxu0 0.0
    %714 = vmatpush1.msra.mxu0 %v122
    %715 = vmatprep.subr.mxu0 0.0
    %716 = vmatpush1.msra.mxu0 %v123
    %717 = vmatprep.subr.mxu0 0.0
    %718 = vmatpush1.msra.mxu0 %v124
    %719 = vmatprep.subr.mxu0 0.0
    %720 = vmatpush1.msra.mxu0 %v125
    %721 = vmatprep.subr.mxu0 0.0
    %722 = vmatpush1.msra.mxu0 0.0
    %723 = vmatprep.subr.mxu0 0.0
    %724 = vmatpush1.msra.mxu0 0.0
    %725 = vmatprep.subr.mxu0 0.0
    %726 = vmatpush1.msra.mxu0 0.0
    %727 = vmatprep.subr.mxu0 0.0
    %728 = vmatpush1.msra.mxu0 0.0
    %729 = vmatprep.subr.mxu0 0.0
    %730 = vmatpush1.msra.mxu0 0.0
    %731 = vmatprep.subr.mxu0 0.0
    %732 = vmatpush1.msra.mxu0 0.0
    %733 = vmatprep.subr.mxu0 0.0
    %734 = vmatpush1.msra.mxu0 0.0
    %735 = vmatprep.subr.mxu0 0.0
    %736 = vmatpush1.msra.mxu0 0.0
    %737 = vmatprep.subr.mxu0 0.0
    %738 = vmatpush1.msra.mxu0 0.0
    %739 = vmatprep.subr.mxu0 0.0
    %740 = vmatpush1.msra.mxu0 0.0
    %741 = vmatprep.subr.mxu0 0.0
    %742 = vmatpush1.msra.mxu0 0.0
    %743 = vmatprep.subr.mxu0 0.0
    %744 = vmatpush1.msra.mxu0 0.0
    %745 = vmatprep.subr.mxu0 0.0
    %746 = vmatpush1.msra.mxu0 0.0
    %747 = vmatprep.subr.mxu0 0.0
    %748 = vmatpush1.msra.mxu0 0.0
    %749 = vmatprep.subr.mxu0 0.0
    %750 = vmatpush1.msra.mxu0 0.0
    %751 = vmatprep.subr.mxu0 0.0
    %752 = vmatpush1.msra.mxu0 0.0
    %753 = vmatprep.subr.mxu0 0.0
    %754 = vmatpush1.msra.mxu0 0.0
    %755 = vmatprep.subr.mxu0 0.0
    %756 = vmatpush1.msra.mxu0 0.0
    %757 = vmatprep.subr.mxu0 0.0
    %758 = vmatpush1.msra.mxu0 0.0
    %759 = vmatprep.subr.mxu0 0.0
    %760 = vmatpush1.msra.mxu0 0.0
    %761 = vmatprep.subr.mxu0 0.0
    %762 = vmatpush1.msra.mxu0 0.0
    %763 = vmatprep.subr.mxu0 0.0
    %764 = vmatpush1.msra.mxu0 0.0
    %765 = vmatprep.subr.mxu0 0.0
    %766 = vmatpush1.msra.mxu0 0.0
    %767 = vmatprep.subr.mxu0 0.0
    %768 = vmatpush1.msra.mxu0 0.0
    %769 = vmatprep.subr.mxu0 0.0
    %770 = vmatpush1.msra.mxu0 0.0
    %771 = vmatprep.subr.mxu0 0.0
    %772 = vmatpush1.msra.mxu0 0.0
    %773 = vmatprep.subr.mxu0 0.0
    %774 = vmatpush1.msra.mxu0 0.0
    %775 = vmatprep.subr.mxu0 0.0
    %776 = vmatpush1.msra.mxu0 0.0
    %777 = vmatprep.mubr.f32.mxu0 0.0
    %778 = vmatmul.mubr.f32.gmra.mrb[0].mxu0 %v711
    %v779 = vpop.f32.mrb[0].mxu0
    %v780 = vadd.f32 0.0, %v779
    %v781 = vpop.f32.mrb[0].mxu0
    %782 = vdwg.mxu0
    %v783 = vadd.f32 %v707, %v780
    %785 = vrot.lane.b32.xlu0 %v706, 64
    %v786 = vpop.permute.xlu0 %785
    %v787 = vsel %vm164, %v786, 0
    %789 = vmatprep.subr.mxu0 0.0
    %790 = vmatpush1.msra.mxu0 %v130
    %791 = vmatprep.subr.mxu0 0.0
    %792 = vmatpush1.msra.mxu0 %v131
    %793 = vmatprep.subr.mxu0 0.0
    %794 = vmatpush1.msra.mxu0 %v132
    %795 = vmatprep.subr.mxu0 0.0
    %796 = vmatpush1.msra.mxu0 %v133
    %797 = vmatprep.subr.mxu0 0.0
    %798 = vmatpush1.msra.mxu0 0.0
    %799 = vmatprep.subr.mxu0 0.0
    %800 = vmatpush1.msra.mxu0 0.0
    %801 = vmatprep.subr.mxu0 0.0
    %802 = vmatpush1.msra.mxu0 0.0
    %803 = vmatprep.subr.mxu0 0.0
    %804 = vmatpush1.msra.mxu0 0.0
    %805 = vmatprep.subr.mxu0 0.0
    %806 = vmatpush1.msra.mxu0 0.0
    %807 = vmatprep.subr.mxu0 0.0
    %808 = vmatpush1.msra.mxu0 0.0
    %809 = vmatprep.subr.mxu0 0.0
    %810 = vmatpush1.msra.mxu0 0.0
    %811 = vmatprep.subr.mxu0 0.0
    %812 = vmatpush1.msra.mxu0 0.0
    %813 = vmatprep.subr.mxu0 0.0
    %814 = vmatpush1.msra.mxu0 0.0
    %815 = vmatprep.subr.mxu0 0.0
    %816 = vmatpush1.msra.mxu0 0.0
    %817 = vmatprep.subr.mxu0 0.0
    %818 = vmatpush1.msra.mxu0 0.0
    %819 = vmatprep.subr.mxu0 0.0
    %820 = vmatpush1.msra.mxu0 0.0
    %821 = vmatprep.subr.mxu0 0.0
    %822 = vmatpush1.msra.mxu0 0.0
    %823 = vmatprep.subr.mxu0 0.0
    %824 = vmatpush1.msra.mxu0 0.0
    %825 = vmatprep.subr.mxu0 0.0
    %826 = vmatpush1.msra.mxu0 0.0
    %827 = vmatprep.subr.mxu0 0.0
    %828 = vmatpush1.msra.mxu0 0.0
    %829 = vmatprep.subr.mxu0 0.0
    %830 = vmatpush1.msra.mxu0 0.0
    %831 = vmatprep.subr.mxu0 0.0
    %832 = vmatpush1.msra.mxu0 0.0
    %833 = vmatprep.subr.mxu0 0.0
    %834 = vmatpush1.msra.mxu0 0.0
    %835 = vmatprep.subr.mxu0 0.0
    %836 = vmatpush1.msra.mxu0 0.0
    %837 = vmatprep.subr.mxu0 0.0
    %838 = vmatpush1.msra.mxu0 0.0
    %839 = vmatprep.subr.mxu0 0.0
    %840 = vmatpush1.msra.mxu0 0.0
    %841 = vmatprep.subr.mxu0 0.0
    %842 = vmatpush1.msra.mxu0 0.0
    %843 = vmatprep.subr.mxu0 0.0
    %844 = vmatpush1.msra.mxu0 0.0
    %845 = vmatprep.subr.mxu0 0.0
    %846 = vmatpush1.msra.mxu0 0.0
    %847 = vmatprep.subr.mxu0 0.0
    %848 = vmatpush1.msra.mxu0 0.0
    %849 = vmatprep.subr.mxu0 0.0
    %850 = vmatpush1.msra.mxu0 0.0
    %851 = vmatprep.subr.mxu0 0.0
    %852 = vmatpush1.msra.mxu0 0.0
    %853 = vmatprep.mubr.f32.mxu0 0.0
    %854 = vmatmul.mubr.f32.gmra.mrb[0].mxu0 %v787
    %v855 = vpop.f32.mrb[0].mxu0
    %v856 = vadd.f32 0.0, %v855
    %v857 = vpop.f32.mrb[0].mxu0
    %858 = vdwg.mxu0
    %859 = vmatprep.subr.mxu0 0.0
    %860 = vmatpush1.msra.mxu0 %v126
    %861 = vmatprep.subr.mxu0 0.0
    %862 = vmatpush1.msra.mxu0 %v127
    %863 = vmatprep.subr.mxu0 0.0
    %864 = vmatpush1.msra.mxu0 %v128
    %865 = vmatprep.subr.mxu0 0.0
    %866 = vmatpush1.msra.mxu0 %v129
    %867 = vmatprep.subr.mxu0 0.0
    %868 = vmatpush1.msra.mxu0 0.0
    %869 = vmatprep.subr.mxu0 0.0
    %870 = vmatpush1.msra.mxu0 0.0
    %871 = vmatprep.subr.mxu0 0.0
    %872 = vmatpush1.msra.mxu0 0.0
    %873 = vmatprep.subr.mxu0 0.0
    %874 = vmatpush1.msra.mxu0 0.0
    %875 = vmatprep.subr.mxu0 0.0
    %876 = vmatpush1.msra.mxu0 0.0
    %877 = vmatprep.subr.mxu0 0.0
    %878 = vmatpush1.msra.mxu0 0.0
    %879 = vmatprep.subr.mxu0 0.0
    %880 = vmatpush1.msra.mxu0 0.0
    %881 = vmatprep.subr.mxu0 0.0
    %882 = vmatpush1.msra.mxu0 0.0
    %883 = vmatprep.subr.mxu0 0.0
    %884 = vmatpush1.msra.mxu0 0.0
    %885 = vmatprep.subr.mxu0 0.0
    %886 = vmatpush1.msra.mxu0 0.0
    %887 = vmatprep.subr.mxu0 0.0
    %888 = vmatpush1.msra.mxu0 0.0
    %889 = vmatprep.subr.mxu0 0.0
    %890 = vmatpush1.msra.mxu0 0.0
    %891 = vmatprep.subr.mxu0 0.0
    %892 = vmatpush1.msra.mxu0 0.0
    %893 = vmatprep.subr.mxu0 0.0
    %894 = vmatpush1.msra.mxu0 0.0
    %895 = vmatprep.subr.mxu0 0.0
    %896 = vmatpush1.msra.mxu0 0.0
    %897 = vmatprep.subr.mxu0 0.0
    %898 = vmatpush1.msra.mxu0 0.0
    %899 = vmatprep.subr.mxu0 0.0
    %900 = vmatpush1.msra.mxu0 0.0
    %901 = vmatprep.subr.mxu0 0.0
    %902 = vmatpush1.msra.mxu0 0.0
    %903 = vmatprep.subr.mxu0 0.0
    %904 = vmatpush1.msra.mxu0 0.0
    %905 = vmatprep.subr.mxu0 0.0
    %906 = vmatpush1.msra.mxu0 0.0
    %907 = vmatprep.subr.mxu0 0.0
    %908 = vmatpush1.msra.mxu0 0.0
    %909 = vmatprep.subr.mxu0 0.0
    %910 = vmatpush1.msra.mxu0 0.0
    %911 = vmatprep.subr.mxu0 0.0
    %912 = vmatpush1.msra.mxu0 0.0
    %913 = vmatprep.subr.mxu0 0.0
    %914 = vmatpush1.msra.mxu0 0.0
    %915 = vmatprep.subr.mxu0 0.0
    %916 = vmatpush1.msra.mxu0 0.0
    %917 = vmatprep.subr.mxu0 0.0
    %918 = vmatpush1.msra.mxu0 0.0
    %919 = vmatprep.subr.mxu0 0.0
    %920 = vmatpush1.msra.mxu0 0.0
    %921 = vmatprep.subr.mxu0 0.0
    %922 = vmatpush1.msra.mxu0 0.0
    %923 = vmatprep.mubr.f32.mxu0 0.0
    %924 = vmatmul.mubr.f32.gmra.mrb[0].mxu0 %v711
    %v925 = vpop.f32.mrb[0].mxu0
    %v926 = vadd.f32 %v856, %v925
    %v927 = vpop.f32.mrb[0].mxu0
    %928 = vdwg.mxu0
    %v929 = vadd.f32 %v926, %v385
    %v930 = vxor.u32 %v783, 2147483648
    %v931 = vmul.f32 %v930, 1.442695
    %v932 = vpow.pop %v931
    %v933 = vadd.f32 %v932, 1.0
    %v934 = vrcp.pop %v933
    %v935 = vmul.f32 1.0, %v934
    %v936 = vtanh.pop %v783
    %v937 = vmul.f32 %v935, %v676
    %939 = vrot.lane.b32.xlu0 %v936, 32
    %v940 = vpop.permute.xlu0 %939
    %v942 = vmul.f32 %v935, %v940
    %944 = vrot.lane.b32.xlu0 %v942, 32
    %v945 = vpop.permute.xlu0 %944
    %v947 = vadd.f32 %v937, %v945
    %v948 = vtanh.pop %v947
    %950 = vrot.lane.b32.xlu0 %v948, 32
    %v951 = vpop.permute.xlu0 %950
    %v953 = vmul.f32 %v935, %v951
    %v954 = vxor.u32 %v929, 2147483648
    %v955 = vmul.f32 %v954, 1.442695
    %v956 = vpow.pop %v955
    %v957 = vadd.f32 %v956, 1.0
    %v958 = vrcp.pop %v957
    %v959 = vmul.f32 1.0, %v958
    %v960 = vtanh.pop %v929
    %v961 = vmul.f32 %v959, %v700
    %963 = vrot.lane.b32.xlu0 %v960, 32
    %v964 = vpop.permute.xlu0 %963
    %v966 = vmul.f32 %v959, %v964
    %968 = vrot.lane.b32.xlu0 %v966, 32
    %v969 = vpop.permute.xlu0 %968
    %v971 = vadd.f32 %v961, %v969
    %v972 = vtanh.pop %v971
    %974 = vrot.lane.b32.xlu0 %v972, 32
    %v975 = vpop.permute.xlu0 %974
    %v977 = vmul.f32 %v959, %v975
    %v978 = vld [vmem:[#allocation2 + $0x8] sm:$0x3]
    %980 = vrot.lane.b32.xlu0 %v953, 64
    %v981 = vpop.permute.xlu0 %980
    %v982 = vsel %vm164, %v981, 0
    %984 = vmatprep.subr.mxu0 0.0
    %985 = vmatpush1.msra.mxu0 %v122
    %986 = vmatprep.subr.mxu0 0.0
    %987 = vmatpush1.msra.mxu0 %v123
    %988 = vmatprep.subr.mxu0 0.0
    %989 = vmatpush1.msra.mxu0 %v124
    %990 = vmatprep.subr.mxu0 0.0
    %991 = vmatpush1.msra.mxu0 %v125
    %992 = vmatprep.subr.mxu0 0.0
    %993 = vmatpush1.msra.mxu0 0.0
    %994 = vmatprep.subr.mxu0 0.0
    %995 = vmatpush1.msra.mxu0 0.0
    %996 = vmatprep.subr.mxu0 0.0
    %997 = vmatpush1.msra.mxu0 0.0
    %998 = vmatprep.subr.mxu0 0.0
    %999 = vmatpush1.msra.mxu0 0.0
    %1000 = vmatprep.subr.mxu0 0.0
    %1001 = vmatpush1.msra.mxu0 0.0
    %1002 = vmatprep.subr.mxu0 0.0
    %1003 = vmatpush1.msra.mxu0 0.0
    %1004 = vmatprep.subr.mxu0 0.0
    %1005 = vmatpush1.msra.mxu0 0.0
    %1006 = vmatprep.subr.mxu0 0.0
    %1007 = vmatpush1.msra.mxu0 0.0
    %1008 = vmatprep.subr.mxu0 0.0
    %1009 = vmatpush1.msra.mxu0 0.0
    %1010 = vmatprep.subr.mxu0 0.0
    %1011 = vmatpush1.msra.mxu0 0.0
    %1012 = vmatprep.subr.mxu0 0.0
    %1013 = vmatpush1.msra.mxu0 0.0
    %1014 = vmatprep.subr.mxu0 0.0
    %1015 = vmatpush1.msra.mxu0 0.0
    %1016 = vmatprep.subr.mxu0 0.0
    %1017 = vmatpush1.msra.mxu0 0.0
    %1018 = vmatprep.subr.mxu0 0.0
    %1019 = vmatpush1.msra.mxu0 0.0
    %1020 = vmatprep.subr.mxu0 0.0
    %1021 = vmatpush1.msra.mxu0 0.0
    %1022 = vmatprep.subr.mxu0 0.0
    %1023 = vmatpush1.msra.mxu0 0.0
    %1024 = vmatprep.subr.mxu0 0.0
    %1025 = vmatpush1.msra.mxu0 0.0
    %1026 = vmatprep.subr.mxu0 0.0
    %1027 = vmatpush1.msra.mxu0 0.0
    %1028 = vmatprep.subr.mxu0 0.0
    %1029 = vmatpush1.msra.mxu0 0.0
    %1030 = vmatprep.subr.mxu0 0.0
    %1031 = vmatpush1.msra.mxu0 0.0
    %1032 = vmatprep.subr.mxu0 0.0
    %1033 = vmatpush1.msra.mxu0 0.0
    %1034 = vmatprep.subr.mxu0 0.0
    %1035 = vmatpush1.msra.mxu0 0.0
    %1036 = vmatprep.subr.mxu0 0.0
    %1037 = vmatpush1.msra.mxu0 0.0
    %1038 = vmatprep.subr.mxu0 0.0
    %1039 = vmatpush1.msra.mxu0 0.0
    %1040 = vmatprep.subr.mxu0 0.0
    %1041 = vmatpush1.msra.mxu0 0.0
    %1042 = vmatprep.subr.mxu0 0.0
    %1043 = vmatpush1.msra.mxu0 0.0
    %1044 = vmatprep.subr.mxu0 0.0
    %1045 = vmatpush1.msra.mxu0 0.0
    %1046 = vmatprep.subr.mxu0 0.0
    %1047 = vmatpush1.msra.mxu0 0.0
    %1048 = vmatprep.mubr.f32.mxu0 0.0
    %1049 = vmatmul.mubr.f32.gmra.mrb[0].mxu0 %v982
    %v1050 = vpop.f32.mrb[0].mxu0
    %v1051 = vadd.f32 0.0, %v1050
    %v1052 = vpop.f32.mrb[0].mxu0
    %1053 = vdwg.mxu0
    %v1054 = vadd.f32 %v978, %v1051
    %1056 = vrot.lane.b32.xlu0 %v977, 64
    %v1057 = vpop.permute.xlu0 %1056
    %v1058 = vsel %vm164, %v1057, 0
    %1060 = vmatprep.subr.mxu0 0.0
    %1061 = vmatpush1.msra.mxu0 %v130
    %1062 = vmatprep.subr.mxu0 0.0
    %1063 = vmatpush1.msra.mxu0 %v131
    %1064 = vmatprep.subr.mxu0 0.0
    %1065 = vmatpush1.msra.mxu0 %v132
    %1066 = vmatprep.subr.mxu0 0.0
    %1067 = vmatpush1.msra.mxu0 %v133
    %1068 = vmatprep.subr.mxu0 0.0
    %1069 = vmatpush1.msra.mxu0 0.0
    %1070 = vmatprep.subr.mxu0 0.0
    %1071 = vmatpush1.msra.mxu0 0.0
    %1072 = vmatprep.subr.mxu0 0.0
    %1073 = vmatpush1.msra.mxu0 0.0
    %1074 = vmatprep.subr.mxu0 0.0
    %1075 = vmatpush1.msra.mxu0 0.0
    %1076 = vmatprep.subr.mxu0 0.0
    %1077 = vmatpush1.msra.mxu0 0.0
    %1078 = vmatprep.subr.mxu0 0.0
    %1079 = vmatpush1.msra.mxu0 0.0
    %1080 = vmatprep.subr.mxu0 0.0
    %1081 = vmatpush1.msra.mxu0 0.0
    %1082 = vmatprep.subr.mxu0 0.0
    %1083 = vmatpush1.msra.mxu0 0.0
    %1084 = vmatprep.subr.mxu0 0.0
    %1085 = vmatpush1.msra.mxu0 0.0
    %1086 = vmatprep.subr.mxu0 0.0
    %1087 = vmatpush1.msra.mxu0 0.0
    %1088 = vmatprep.subr.mxu0 0.0
    %1089 = vmatpush1.msra.mxu0 0.0
    %1090 = vmatprep.subr.mxu0 0.0
    %1091 = vmatpush1.msra.mxu0 0.0
    %1092 = vmatprep.subr.mxu0 0.0
    %1093 = vmatpush1.msra.mxu0 0.0
    %1094 = vmatprep.subr.mxu0 0.0
    %1095 = vmatpush1.msra.mxu0 0.0
    %1096 = vmatprep.subr.mxu0 0.0
    %1097 = vmatpush1.msra.mxu0 0.0
    %1098 = vmatprep.subr.mxu0 0.0
    %1099 = vmatpush1.msra.mxu0 0.0
    %1100 = vmatprep.subr.mxu0 0.0
    %1101 = vmatpush1.msra.mxu0 0.0
    %1102 = vmatprep.subr.mxu0 0.0
    %1103 = vmatpush1.msra.mxu0 0.0
    %1104 = vmatprep.subr.mxu0 0.0
    %1105 = vmatpush1.msra.mxu0 0.0
    %1106 = vmatprep.subr.mxu0 0.0
    %1107 = vmatpush1.msra.mxu0 0.0
    %1108 = vmatprep.subr.mxu0 0.0
    %1109 = vmatpush1.msra.mxu0 0.0
    %1110 = vmatprep.subr.mxu0 0.0
    %1111 = vmatpush1.msra.mxu0 0.0
    %1112 = vmatprep.subr.mxu0 0.0
    %1113 = vmatpush1.msra.mxu0 0.0
    %1114 = vmatprep.subr.mxu0 0.0
    %1115 = vmatpush1.msra.mxu0 0.0
    %1116 = vmatprep.subr.mxu0 0.0
    %1117 = vmatpush1.msra.mxu0 0.0
    %1118 = vmatprep.subr.mxu0 0.0
    %1119 = vmatpush1.msra.mxu0 0.0
    %1120 = vmatprep.subr.mxu0 0.0
    %1121 = vmatpush1.msra.mxu0 0.0
    %1122 = vmatprep.subr.mxu0 0.0
    %1123 = vmatpush1.msra.mxu0 0.0
    %1124 = vmatprep.mubr.f32.mxu0 0.0
    %1125 = vmatmul.mubr.f32.gmra.mrb[0].mxu0 %v1058
    %v1126 = vpop.f32.mrb[0].mxu0
    %v1127 = vadd.f32 0.0, %v1126
    %v1128 = vpop.f32.mrb[0].mxu0
    %1129 = vdwg.mxu0
    %1130 = vmatprep.subr.mxu0 0.0
    %1131 = vmatpush1.msra.mxu0 %v126
    %1132 = vmatprep.subr.mxu0 0.0
    %1133 = vmatpush1.msra.mxu0 %v127
    %1134 = vmatprep.subr.mxu0 0.0
    %1135 = vmatpush1.msra.mxu0 %v128
    %1136 = vmatprep.subr.mxu0 0.0
    %1137 = vmatpush1.msra.mxu0 %v129
    %1138 = vmatprep.subr.mxu0 0.0
    %1139 = vmatpush1.msra.mxu0 0.0
    %1140 = vmatprep.subr.mxu0 0.0
    %1141 = vmatpush1.msra.mxu0 0.0
    %1142 = vmatprep.subr.mxu0 0.0
    %1143 = vmatpush1.msra.mxu0 0.0
    %1144 = vmatprep.subr.mxu0 0.0
    %1145 = vmatpush1.msra.mxu0 0.0
    %1146 = vmatprep.subr.mxu0 0.0
    %1147 = vmatpush1.msra.mxu0 0.0
    %1148 = vmatprep.subr.mxu0 0.0
    %1149 = vmatpush1.msra.mxu0 0.0
    %1150 = vmatprep.subr.mxu0 0.0
    %1151 = vmatpush1.msra.mxu0 0.0
    %1152 = vmatprep.subr.mxu0 0.0
    %1153 = vmatpush1.msra.mxu0 0.0
    %1154 = vmatprep.subr.mxu0 0.0
    %1155 = vmatpush1.msra.mxu0 0.0
    %1156 = vmatprep.subr.mxu0 0.0
    %1157 = vmatpush1.msra.mxu0 0.0
    %1158 = vmatprep.subr.mxu0 0.0
    %1159 = vmatpush1.msra.mxu0 0.0
    %1160 = vmatprep.subr.mxu0 0.0
    %1161 = vmatpush1.msra.mxu0 0.0
    %1162 = vmatprep.subr.mxu0 0.0
    %1163 = vmatpush1.msra.mxu0 0.0
    %1164 = vmatprep.subr.mxu0 0.0
    %1165 = vmatpush1.msra.mxu0 0.0
    %1166 = vmatprep.subr.mxu0 0.0
    %1167 = vmatpush1.msra.mxu0 0.0
    %1168 = vmatprep.subr.mxu0 0.0
    %1169 = vmatpush1.msra.mxu0 0.0
    %1170 = vmatprep.subr.mxu0 0.0
    %1171 = vmatpush1.msra.mxu0 0.0
    %1172 = vmatprep.subr.mxu0 0.0
    %1173 = vmatpush1.msra.mxu0 0.0
    %1174 = vmatprep.subr.mxu0 0.0
    %1175 = vmatpush1.msra.mxu0 0.0
    %1176 = vmatprep.subr.mxu0 0.0
    %1177 = vmatpush1.msra.mxu0 0.0
    %1178 = vmatprep.subr.mxu0 0.0
    %1179 = vmatpush1.msra.mxu0 0.0
    %1180 = vmatprep.subr.mxu0 0.0
    %1181 = vmatpush1.msra.mxu0 0.0
    %1182 = vmatprep.subr.mxu0 0.0
    %1183 = vmatpush1.msra.mxu0 0.0
    %1184 = vmatprep.subr.mxu0 0.0
    %1185 = vmatpush1.msra.mxu0 0.0
    %1186 = vmatprep.subr.mxu0 0.0
    %1187 = vmatpush1.msra.mxu0 0.0
    %1188 = vmatprep.subr.mxu0 0.0
    %1189 = vmatpush1.msra.mxu0 0.0
    %1190 = vmatprep.subr.mxu0 0.0
    %1191 = vmatpush1.msra.mxu0 0.0
    %1192 = vmatprep.subr.mxu0 0.0
    %1193 = vmatpush1.msra.mxu0 0.0
    %1194 = vmatprep.mubr.f32.mxu0 0.0
    %1195 = vmatmul.mubr.f32.gmra.mrb[0].mxu0 %v982
    %v1196 = vpop.f32.mrb[0].mxu0
    %v1197 = vadd.f32 %v1127, %v1196
    %v1198 = vpop.f32.mrb[0].mxu0
    %1199 = vdwg.mxu0
    %v1200 = vadd.f32 %v1197, %v385
    %v1201 = vxor.u32 %v1054, 2147483648
    %v1202 = vmul.f32 %v1201, 1.442695
    %v1203 = vpow.pop %v1202
    %v1204 = vadd.f32 %v1203, 1.0
    %v1205 = vrcp.pop %v1204
    %v1206 = vmul.f32 1.0, %v1205
    %v1207 = vtanh.pop %v1054
    %v1208 = vmul.f32 %v1206, %v947
    %1210 = vrot.lane.b32.xlu0 %v1207, 32
    %v1211 = vpop.permute.xlu0 %1210
    %v1213 = vmul.f32 %v1206, %v1211
    %1215 = vrot.lane.b32.xlu0 %v1213, 32
    %v1216 = vpop.permute.xlu0 %1215
    %v1218 = vadd.f32 %v1208, %v1216
    %v1219 = vtanh.pop %v1218
    %1221 = vrot.lane.b32.xlu0 %v1219, 32
    %v1222 = vpop.permute.xlu0 %1221
    %v1224 = vmul.f32 %v1206, %v1222
    %v1225 = vxor.u32 %v1200, 2147483648
    %v1226 = vmul.f32 %v1225, 1.442695
    %v1227 = vpow.pop %v1226
    %v1228 = vadd.f32 %v1227, 1.0
    %v1229 = vrcp.pop %v1228
    %v1230 = vmul.f32 1.0, %v1229
    %v1231 = vtanh.pop %v1200
    %v1232 = vmul.f32 %v1230, %v971
    %1234 = vrot.lane.b32.xlu0 %v1231, 32
    %v1235 = vpop.permute.xlu0 %1234
    %v1237 = vmul.f32 %v1230, %v1235
    %1239 = vrot.lane.b32.xlu0 %v1237, 32
    %v1240 = vpop.permute.xlu0 %1239
    %v1242 = vadd.f32 %v1232, %v1240
    %v1243 = vtanh.pop %v1242
    %1245 = vrot.lane.b32.xlu0 %v1243, 32
    %v1246 = vpop.permute.xlu0 %1245
    %v1248 = vmul.f32 %v1230, %v1246
    %v1249 = vld [vmem:[#allocation2 + $0xa] sm:$0x3]
    %1251 = vrot.lane.b32.xlu0 %v1224, 64
    %v1252 = vpop.permute.xlu0 %1251
    %v1253 = vsel %vm164, %v1252, 0
    %1255 = vmatprep.subr.mxu0 0.0
    %1256 = vmatpush1.msra.mxu0 %v122
    %1257 = vmatprep.subr.mxu0 0.0
    %1258 = vmatpush1.msra.mxu0 %v123
    %1259 = vmatprep.subr.mxu0 0.0
    %1260 = vmatpush1.msra.mxu0 %v124
    %1261 = vmatprep.subr.mxu0 0.0
    %1262 = vmatpush1.msra.mxu0 %v125
    %1263 = vmatprep.subr.mxu0 0.0
    %1264 = vmatpush1.msra.mxu0 0.0
    %1265 = vmatprep.subr.mxu0 0.0
    %1266 = vmatpush1.msra.mxu0 0.0
    %1267 = vmatprep.subr.mxu0 0.0
    %1268 = vmatpush1.msra.mxu0 0.0
    %1269 = vmatprep.subr.mxu0 0.0
    %1270 = vmatpush1.msra.mxu0 0.0
    %1271 = vmatprep.subr.mxu0 0.0
    %1272 = vmatpush1.msra.mxu0 0.0
    %1273 = vmatprep.subr.mxu0 0.0
    %1274 = vmatpush1.msra.mxu0 0.0
    %1275 = vmatprep.subr.mxu0 0.0
    %1276 = vmatpush1.msra.mxu0 0.0
    %1277 = vmatprep.subr.mxu0 0.0
    %1278 = vmatpush1.msra.mxu0 0.0
    %1279 = vmatprep.subr.mxu0 0.0
    %1280 = vmatpush1.msra.mxu0 0.0
    %1281 = vmatprep.subr.mxu0 0.0
    %1282 = vmatpush1.msra.mxu0 0.0
    %1283 = vmatprep.subr.mxu0 0.0
    %1284 = vmatpush1.msra.mxu0 0.0
    %1285 = vmatprep.subr.mxu0 0.0
    %1286 = vmatpush1.msra.mxu0 0.0
    %1287 = vmatprep.subr.mxu0 0.0
    %1288 = vmatpush1.msra.mxu0 0.0
    %1289 = vmatprep.subr.mxu0 0.0
    %1290 = vmatpush1.msra.mxu0 0.0
    %1291 = vmatprep.subr.mxu0 0.0
    %1292 = vmatpush1.msra.mxu0 0.0
    %1293 = vmatprep.subr.mxu0 0.0
    %1294 = vmatpush1.msra.mxu0 0.0
    %1295 = vmatprep.subr.mxu0 0.0
    %1296 = vmatpush1.msra.mxu0 0.0
    %1297 = vmatprep.subr.mxu0 0.0
    %1298 = vmatpush1.msra.mxu0 0.0
    %1299 = vmatprep.subr.mxu0 0.0
    %1300 = vmatpush1.msra.mxu0 0.0
    %1301 = vmatprep.subr.mxu0 0.0
    %1302 = vmatpush1.msra.mxu0 0.0
    %1303 = vmatprep.subr.mxu0 0.0
    %1304 = vmatpush1.msra.mxu0 0.0
    %1305 = vmatprep.subr.mxu0 0.0
    %1306 = vmatpush1.msra.mxu0 0.0
    %1307 = vmatprep.subr.mxu0 0.0
    %1308 = vmatpush1.msra.mxu0 0.0
    %1309 = vmatprep.subr.mxu0 0.0
    %1310 = vmatpush1.msra.mxu0 0.0
    %1311 = vmatprep.subr.mxu0 0.0
    %1312 = vmatpush1.msra.mxu0 0.0
    %1313 = vmatprep.subr.mxu0 0.0
    %1314 = vmatpush1.msra.mxu0 0.0
    %1315 = vmatprep.subr.mxu0 0.0
    %1316 = vmatpush1.msra.mxu0 0.0
    %1317 = vmatprep.subr.mxu0 0.0
    %1318 = vmatpush1.msra.mxu0 0.0
    %1319 = vmatprep.mubr.f32.mxu0 0.0
    %1320 = vmatmul.mubr.f32.gmra.mrb[0].mxu0 %v1253
    %v1321 = vpop.f32.mrb[0].mxu0
    %v1322 = vadd.f32 0.0, %v1321
    %v1323 = vpop.f32.mrb[0].mxu0
    %1324 = vdwg.mxu0
    %v1325 = vadd.f32 %v1249, %v1322
    %1327 = vrot.lane.b32.xlu0 %v1248, 64
    %v1328 = vpop.permute.xlu0 %1327
    %v1329 = vsel %vm164, %v1328, 0
    %1331 = vmatprep.subr.mxu0 0.0
    %1332 = vmatpush1.msra.mxu0 %v130
    %1333 = vmatprep.subr.mxu0 0.0
    %1334 = vmatpush1.msra.mxu0 %v131
    %1335 = vmatprep.subr.mxu0 0.0
    %1336 = vmatpush1.msra.mxu0 %v132
    %1337 = vmatprep.subr.mxu0 0.0
    %1338 = vmatpush1.msra.mxu0 %v133
    %1339 = vmatprep.subr.mxu0 0.0
    %1340 = vmatpush1.msra.mxu0 0.0
    %1341 = vmatprep.subr.mxu0 0.0
    %1342 = vmatpush1.msra.mxu0 0.0
    %1343 = vmatprep.subr.mxu0 0.0
    %1344 = vmatpush1.msra.mxu0 0.0
    %1345 = vmatprep.subr.mxu0 0.0
    %1346 = vmatpush1.msra.mxu0 0.0
    %1347 = vmatprep.subr.mxu0 0.0
    %1348 = vmatpush1.msra.mxu0 0.0
    %1349 = vmatprep.subr.mxu0 0.0
    %1350 = vmatpush1.msra.mxu0 0.0
    %1351 = vmatprep.subr.mxu0 0.0
    %1352 = vmatpush1.msra.mxu0 0.0
    %1353 = vmatprep.subr.mxu0 0.0
    %1354 = vmatpush1.msra.mxu0 0.0
    %1355 = vmatprep.subr.mxu0 0.0
    %1356 = vmatpush1.msra.mxu0 0.0
    %1357 = vmatprep.subr.mxu0 0.0
    %1358 = vmatpush1.msra.mxu0 0.0
    %1359 = vmatprep.subr.mxu0 0.0
    %1360 = vmatpush1.msra.mxu0 0.0
    %1361 = vmatprep.subr.mxu0 0.0
    %1362 = vmatpush1.msra.mxu0 0.0
    %1363 = vmatprep.subr.mxu0 0.0
    %1364 = vmatpush1.msra.mxu0 0.0
    %1365 = vmatprep.subr.mxu0 0.0
    %1366 = vmatpush1.msra.mxu0 0.0
    %1367 = vmatprep.subr.mxu0 0.0
    %1368 = vmatpush1.msra.mxu0 0.0
    %1369 = vmatprep.subr.mxu0 0.0
    %1370 = vmatpush1.msra.mxu0 0.0
    %1371 = vmatprep.subr.mxu0 0.0
    %1372 = vmatpush1.msra.mxu0 0.0
    %1373 = vmatprep.subr.mxu0 0.0
    %1374 = vmatpush1.msra.mxu0 0.0
    %1375 = vmatprep.subr.mxu0 0.0
    %1376 = vmatpush1.msra.mxu0 0.0
    %1377 = vmatprep.subr.mxu0 0.0
    %1378 = vmatpush1.msra.mxu0 0.0
    %1379 = vmatprep.subr.mxu0 0.0
    %1380 = vmatpush1.msra.mxu0 0.0
    %1381 = vmatprep.subr.mxu0 0.0
    %1382 = vmatpush1.msra.mxu0 0.0
    %1383 = vmatprep.subr.mxu0 0.0
    %1384 = vmatpush1.msra.mxu0 0.0
    %1385 = vmatprep.subr.mxu0 0.0
    %1386 = vmatpush1.msra.mxu0 0.0
    %1387 = vmatprep.subr.mxu0 0.0
    %1388 = vmatpush1.msra.mxu0 0.0
    %1389 = vmatprep.subr.mxu0 0.0
    %1390 = vmatpush1.msra.mxu0 0.0
    %1391 = vmatprep.subr.mxu0 0.0
    %1392 = vmatpush1.msra.mxu0 0.0
    %1393 = vmatprep.subr.mxu0 0.0
    %1394 = vmatpush1.msra.mxu0 0.0
    %1395 = vmatprep.mubr.f32.mxu0 0.0
    %1396 = vmatmul.mubr.f32.gmra.mrb[0].mxu0 %v1329
    %v1397 = vpop.f32.mrb[0].mxu0
    %v1398 = vadd.f32 0.0, %v1397
    %v1399 = vpop.f32.mrb[0].mxu0
    %1400 = vdwg.mxu0
    %1401 = vmatprep.subr.mxu0 0.0
    %1402 = vmatpush1.msra.mxu0 %v126
    %1403 = vmatprep.subr.mxu0 0.0
    %1404 = vmatpush1.msra.mxu0 %v127
    %1405 = vmatprep.subr.mxu0 0.0
    %1406 = vmatpush1.msra.mxu0 %v128
    %1407 = vmatprep.subr.mxu0 0.0
    %1408 = vmatpush1.msra.mxu0 %v129
    %1409 = vmatprep.subr.mxu0 0.0
    %1410 = vmatpush1.msra.mxu0 0.0
    %1411 = vmatprep.subr.mxu0 0.0
    %1412 = vmatpush1.msra.mxu0 0.0
    %1413 = vmatprep.subr.mxu0 0.0
    %1414 = vmatpush1.msra.mxu0 0.0
    %1415 = vmatprep.subr.mxu0 0.0
    %1416 = vmatpush1.msra.mxu0 0.0
    %1417 = vmatprep.subr.mxu0 0.0
    %1418 = vmatpush1.msra.mxu0 0.0
    %1419 = vmatprep.subr.mxu0 0.0
    %1420 = vmatpush1.msra.mxu0 0.0
    %1421 = vmatprep.subr.mxu0 0.0
    %1422 = vmatpush1.msra.mxu0 0.0
    %1423 = vmatprep.subr.mxu0 0.0
    %1424 = vmatpush1.msra.mxu0 0.0
    %1425 = vmatprep.subr.mxu0 0.0
    %1426 = vmatpush1.msra.mxu0 0.0
    %1427 = vmatprep.subr.mxu0 0.0
    %1428 = vmatpush1.msra.mxu0 0.0
    %1429 = vmatprep.subr.mxu0 0.0
    %1430 = vmatpush1.msra.mxu0 0.0
    %1431 = vmatprep.subr.mxu0 0.0
    %1432 = vmatpush1.msra.mxu0 0.0
    %1433 = vmatprep.subr.mxu0 0.0
    %1434 = vmatpush1.msra.mxu0 0.0
    %1435 = vmatprep.subr.mxu0 0.0
    %1436 = vmatpush1.msra.mxu0 0.0
    %1437 = vmatprep.subr.mxu0 0.0
    %1438 = vmatpush1.msra.mxu0 0.0
    %1439 = vmatprep.subr.mxu0 0.0
    %1440 = vmatpush1.msra.mxu0 0.0
    %1441 = vmatprep.subr.mxu0 0.0
    %1442 = vmatpush1.msra.mxu0 0.0
    %1443 = vmatprep.subr.mxu0 0.0
    %1444 = vmatpush1.msra.mxu0 0.0
    %1445 = vmatprep.subr.mxu0 0.0
    %1446 = vmatpush1.msra.mxu0 0.0
    %1447 = vmatprep.subr.mxu0 0.0
    %1448 = vmatpush1.msra.mxu0 0.0
    %1449 = vmatprep.subr.mxu0 0.0
    %1450 = vmatpush1.msra.mxu0 0.0
    %1451 = vmatprep.subr.mxu0 0.0
    %1452 = vmatpush1.msra.mxu0 0.0
    %1453 = vmatprep.subr.mxu0 0.0
    %1454 = vmatpush1.msra.mxu0 0.0
    %1455 = vmatprep.subr.mxu0 0.0
    %1456 = vmatpush1.msra.mxu0 0.0
    %1457 = vmatprep.subr.mxu0 0.0
    %1458 = vmatpush1.msra.mxu0 0.0
    %1459 = vmatprep.subr.mxu0 0.0
    %1460 = vmatpush1.msra.mxu0 0.0
    %1461 = vmatprep.subr.mxu0 0.0
    %1462 = vmatpush1.msra.mxu0 0.0
    %1463 = vmatprep.subr.mxu0 0.0
    %1464 = vmatpush1.msra.mxu0 0.0
    %1465 = vmatprep.mubr.f32.mxu0 0.0
    %1466 = vmatmul.mubr.f32.gmra.mrb[0].mxu0 %v1253
    %v1467 = vpop.f32.mrb[0].mxu0
    %v1468 = vadd.f32 %v1398, %v1467
    %v1469 = vpop.f32.mrb[0].mxu0
    %1470 = vdwg.mxu0
    %v1471 = vadd.f32 %v1468, %v385
    %v1472 = vxor.u32 %v1325, 2147483648
    %v1473 = vmul.f32 %v1472, 1.442695
    %v1474 = vpow.pop %v1473
    %v1475 = vadd.f32 %v1474, 1.0
    %v1476 = vrcp.pop %v1475
    %v1477 = vmul.f32 1.0, %v1476
    %v1478 = vtanh.pop %v1325
    %v1479 = vmul.f32 %v1477, %v1218
    %1481 = vrot.lane.b32.xlu0 %v1478, 32
    %v1482 = vpop.permute.xlu0 %1481
    %v1484 = vmul.f32 %v1477, %v1482
    %1486 = vrot.lane.b32.xlu0 %v1484, 32
    %v1487 = vpop.permute.xlu0 %1486
    %v1489 = vadd.f32 %v1479, %v1487
    %v1490 = vtanh.pop %v1489
    %1492 = vrot.lane.b32.xlu0 %v1490, 32
    %v1493 = vpop.permute.xlu0 %1492
    %v1495 = vmul.f32 %v1477, %v1493
    %v1496 = vxor.u32 %v1471, 2147483648
    %v1497 = vmul.f32 %v1496, 1.442695
    %v1498 = vpow.pop %v1497
    %v1499 = vadd.f32 %v1498, 1.0
    %v1500 = vrcp.pop %v1499
    %v1501 = vmul.f32 1.0, %v1500
    %v1502 = vtanh.pop %v1471
    %v1503 = vmul.f32 %v1501, %v1242
    %1505 = vrot.lane.b32.xlu0 %v1502, 32
    %v1506 = vpop.permute.xlu0 %1505
    %v1508 = vmul.f32 %v1501, %v1506
    %1510 = vrot.lane.b32.xlu0 %v1508, 32
    %v1511 = vpop.permute.xlu0 %1510
    %v1513 = vadd.f32 %v1503, %v1511
    %v1514 = vtanh.pop %v1513
    %1516 = vrot.lane.b32.xlu0 %v1514, 32
    %v1517 = vpop.permute.xlu0 %1516
    %v1519 = vmul.f32 %v1501, %v1517
    %v1520 = vld [vmem:[#allocation2 + $0xc] sm:$0x3]
    %1522 = vrot.lane.b32.xlu0 %v1495, 64
    %v1523 = vpop.permute.xlu0 %1522
    %v1524 = vsel %vm164, %v1523, 0
    %1526 = vmatprep.subr.mxu0 0.0
    %1527 = vmatpush1.msra.mxu0 %v122
    %1528 = vmatprep.subr.mxu0 0.0
    %1529 = vmatpush1.msra.mxu0 %v123
    %1530 = vmatprep.subr.mxu0 0.0
    %1531 = vmatpush1.msra.mxu0 %v124
    %1532 = vmatprep.subr.mxu0 0.0
    %1533 = vmatpush1.msra.mxu0 %v125
    %1534 = vmatprep.subr.mxu0 0.0
    %1535 = vmatpush1.msra.mxu0 0.0
    %1536 = vmatprep.subr.mxu0 0.0
    %1537 = vmatpush1.msra.mxu0 0.0
    %1538 = vmatprep.subr.mxu0 0.0
    %1539 = vmatpush1.msra.mxu0 0.0
    %1540 = vmatprep.subr.mxu0 0.0
    %1541 = vmatpush1.msra.mxu0 0.0
    %1542 = vmatprep.subr.mxu0 0.0
    %1543 = vmatpush1.msra.mxu0 0.0
    %1544 = vmatprep.subr.mxu0 0.0
    %1545 = vmatpush1.msra.mxu0 0.0
    %1546 = vmatprep.subr.mxu0 0.0
    %1547 = vmatpush1.msra.mxu0 0.0
    %1548 = vmatprep.subr.mxu0 0.0
    %1549 = vmatpush1.msra.mxu0 0.0
    %1550 = vmatprep.subr.mxu0 0.0
    %1551 = vmatpush1.msra.mxu0 0.0
    %1552 = vmatprep.subr.mxu0 0.0
    %1553 = vmatpush1.msra.mxu0 0.0
    %1554 = vmatprep.subr.mxu0 0.0
    %1555 = vmatpush1.msra.mxu0 0.0
    %1556 = vmatprep.subr.mxu0 0.0
    %1557 = vmatpush1.msra.mxu0 0.0
    %1558 = vmatprep.subr.mxu0 0.0
    %1559 = vmatpush1.msra.mxu0 0.0
    %1560 = vmatprep.subr.mxu0 0.0
    %1561 = vmatpush1.msra.mxu0 0.0
    %1562 = vmatprep.subr.mxu0 0.0
    %1563 = vmatpush1.msra.mxu0 0.0
    %1564 = vmatprep.subr.mxu0 0.0
    %1565 = vmatpush1.msra.mxu0 0.0
    %1566 = vmatprep.subr.mxu0 0.0
    %1567 = vmatpush1.msra.mxu0 0.0
    %1568 = vmatprep.subr.mxu0 0.0
    %1569 = vmatpush1.msra.mxu0 0.0
    %1570 = vmatprep.subr.mxu0 0.0
    %1571 = vmatpush1.msra.mxu0 0.0
    %1572 = vmatprep.subr.mxu0 0.0
    %1573 = vmatpush1.msra.mxu0 0.0
    %1574 = vmatprep.subr.mxu0 0.0
    %1575 = vmatpush1.msra.mxu0 0.0
    %1576 = vmatprep.subr.mxu0 0.0
    %1577 = vmatpush1.msra.mxu0 0.0
    %1578 = vmatprep.subr.mxu0 0.0
    %1579 = vmatpush1.msra.mxu0 0.0
    %1580 = vmatprep.subr.mxu0 0.0
    %1581 = vmatpush1.msra.mxu0 0.0
    %1582 = vmatprep.subr.mxu0 0.0
    %1583 = vmatpush1.msra.mxu0 0.0
    %1584 = vmatprep.subr.mxu0 0.0
    %1585 = vmatpush1.msra.mxu0 0.0
    %1586 = vmatprep.subr.mxu0 0.0
    %1587 = vmatpush1.msra.mxu0 0.0
    %1588 = vmatprep.subr.mxu0 0.0
    %1589 = vmatpush1.msra.mxu0 0.0
    %1590 = vmatprep.mubr.f32.mxu0 0.0
    %1591 = vmatmul.mubr.f32.gmra.mrb[0].mxu0 %v1524
    %v1592 = vpop.f32.mrb[0].mxu0
    %v1593 = vadd.f32 0.0, %v1592
    %v1594 = vpop.f32.mrb[0].mxu0
    %1595 = vdwg.mxu0
    %v1596 = vadd.f32 %v1520, %v1593
    %1598 = vrot.lane.b32.xlu0 %v1519, 64
    %v1599 = vpop.permute.xlu0 %1598
    %v1600 = vsel %vm164, %v1599, 0
    %1602 = vmatprep.subr.mxu0 0.0
    %1603 = vmatpush1.msra.mxu0 %v130
    %1604 = vmatprep.subr.mxu0 0.0
    %1605 = vmatpush1.msra.mxu0 %v131
    %1606 = vmatprep.subr.mxu0 0.0
    %1607 = vmatpush1.msra.mxu0 %v132
    %1608 = vmatprep.subr.mxu0 0.0
    %1609 = vmatpush1.msra.mxu0 %v133
    %1610 = vmatprep.subr.mxu0 0.0
    %1611 = vmatpush1.msra.mxu0 0.0
    %1612 = vmatprep.subr.mxu0 0.0
    %1613 = vmatpush1.msra.mxu0 0.0
    %1614 = vmatprep.subr.mxu0 0.0
    %1615 = vmatpush1.msra.mxu0 0.0
    %1616 = vmatprep.subr.mxu0 0.0
    %1617 = vmatpush1.msra.mxu0 0.0
    %1618 = vmatprep.subr.mxu0 0.0
    %1619 = vmatpush1.msra.mxu0 0.0
    %1620 = vmatprep.subr.mxu0 0.0
    %1621 = vmatpush1.msra.mxu0 0.0
    %1622 = vmatprep.subr.mxu0 0.0
    %1623 = vmatpush1.msra.mxu0 0.0
    %1624 = vmatprep.subr.mxu0 0.0
    %1625 = vmatpush1.msra.mxu0 0.0
    %1626 = vmatprep.subr.mxu0 0.0
    %1627 = vmatpush1.msra.mxu0 0.0
    %1628 = vmatprep.subr.mxu0 0.0
    %1629 = vmatpush1.msra.mxu0 0.0
    %1630 = vmatprep.subr.mxu0 0.0
    %1631 = vmatpush1.msra.mxu0 0.0
    %1632 = vmatprep.subr.mxu0 0.0
    %1633 = vmatpush1.msra.mxu0 0.0
    %1634 = vmatprep.subr.mxu0 0.0
    %1635 = vmatpush1.msra.mxu0 0.0
    %1636 = vmatprep.subr.mxu0 0.0
    %1637 = vmatpush1.msra.mxu0 0.0
    %1638 = vmatprep.subr.mxu0 0.0
    %1639 = vmatpush1.msra.mxu0 0.0
    %1640 = vmatprep.subr.mxu0 0.0
    %1641 = vmatpush1.msra.mxu0 0.0
    %1642 = vmatprep.subr.mxu0 0.0
    %1643 = vmatpush1.msra.mxu0 0.0
    %1644 = vmatprep.subr.mxu0 0.0
    %1645 = vmatpush1.msra.mxu0 0.0
    %1646 = vmatprep.subr.mxu0 0.0
    %1647 = vmatpush1.msra.mxu0 0.0
    %1648 = vmatprep.subr.mxu0 0.0
    %1649 = vmatpush1.msra.mxu0 0.0
    %1650 = vmatprep.subr.mxu0 0.0
    %1651 = vmatpush1.msra.mxu0 0.0
    %1652 = vmatprep.subr.mxu0 0.0
    %1653 = vmatpush1.msra.mxu0 0.0
    %1654 = vmatprep.subr.mxu0 0.0
    %1655 = vmatpush1.msra.mxu0 0.0
    %1656 = vmatprep.subr.mxu0 0.0
    %1657 = vmatpush1.msra.mxu0 0.0
    %1658 = vmatprep.subr.mxu0 0.0
    %1659 = vmatpush1.msra.mxu0 0.0
    %1660 = vmatprep.subr.mxu0 0.0
    %1661 = vmatpush1.msra.mxu0 0.0
    %1662 = vmatprep.subr.mxu0 0.0
    %1663 = vmatpush1.msra.mxu0 0.0
    %1664 = vmatprep.subr.mxu0 0.0
    %1665 = vmatpush1.msra.mxu0 0.0
    %1666 = vmatprep.mubr.f32.mxu0 0.0
    %1667 = vmatmul.mubr.f32.gmra.mrb[0].mxu0 %v1600
    %v1668 = vpop.f32.mrb[0].mxu0
    %v1669 = vadd.f32 0.0, %v1668
    %v1670 = vpop.f32.mrb[0].mxu0
    %1671 = vdwg.mxu0
    %1672 = vmatprep.subr.mxu0 0.0
    %1673 = vmatpush1.msra.mxu0 %v126
    %1674 = vmatprep.subr.mxu0 0.0
    %1675 = vmatpush1.msra.mxu0 %v127
    %1676 = vmatprep.subr.mxu0 0.0
    %1677 = vmatpush1.msra.mxu0 %v128
    %1678 = vmatprep.subr.mxu0 0.0
    %1679 = vmatpush1.msra.mxu0 %v129
    %1680 = vmatprep.subr.mxu0 0.0
    %1681 = vmatpush1.msra.mxu0 0.0
    %1682 = vmatprep.subr.mxu0 0.0
    %1683 = vmatpush1.msra.mxu0 0.0
    %1684 = vmatprep.subr.mxu0 0.0
    %1685 = vmatpush1.msra.mxu0 0.0
    %1686 = vmatprep.subr.mxu0 0.0
    %1687 = vmatpush1.msra.mxu0 0.0
    %1688 = vmatprep.subr.mxu0 0.0
    %1689 = vmatpush1.msra.mxu0 0.0
    %1690 = vmatprep.subr.mxu0 0.0
    %1691 = vmatpush1.msra.mxu0 0.0
    %1692 = vmatprep.subr.mxu0 0.0
    %1693 = vmatpush1.msra.mxu0 0.0
    %1694 = vmatprep.subr.mxu0 0.0
    %1695 = vmatpush1.msra.mxu0 0.0
    %1696 = vmatprep.subr.mxu0 0.0
    %1697 = vmatpush1.msra.mxu0 0.0
    %1698 = vmatprep.subr.mxu0 0.0
    %1699 = vmatpush1.msra.mxu0 0.0
    %1700 = vmatprep.subr.mxu0 0.0
    %1701 = vmatpush1.msra.mxu0 0.0
    %1702 = vmatprep.subr.mxu0 0.0
    %1703 = vmatpush1.msra.mxu0 0.0
    %1704 = vmatprep.subr.mxu0 0.0
    %1705 = vmatpush1.msra.mxu0 0.0
    %1706 = vmatprep.subr.mxu0 0.0
    %1707 = vmatpush1.msra.mxu0 0.0
    %1708 = vmatprep.subr.mxu0 0.0
    %1709 = vmatpush1.msra.mxu0 0.0
    %1710 = vmatprep.subr.mxu0 0.0
    %1711 = vmatpush1.msra.mxu0 0.0
    %1712 = vmatprep.subr.mxu0 0.0
    %1713 = vmatpush1.msra.mxu0 0.0
    %1714 = vmatprep.subr.mxu0 0.0
    %1715 = vmatpush1.msra.mxu0 0.0
    %1716 = vmatprep.subr.mxu0 0.0
    %1717 = vmatpush1.msra.mxu0 0.0
    %1718 = vmatprep.subr.mxu0 0.0
    %1719 = vmatpush1.msra.mxu0 0.0
    %1720 = vmatprep.subr.mxu0 0.0
    %1721 = vmatpush1.msra.mxu0 0.0
    %1722 = vmatprep.subr.mxu0 0.0
    %1723 = vmatpush1.msra.mxu0 0.0
    %1724 = vmatprep.subr.mxu0 0.0
    %1725 = vmatpush1.msra.mxu0 0.0
    %1726 = vmatprep.subr.mxu0 0.0
    %1727 = vmatpush1.msra.mxu0 0.0
    %1728 = vmatprep.subr.mxu0 0.0
    %1729 = vmatpush1.msra.mxu0 0.0
    %1730 = vmatprep.subr.mxu0 0.0
    %1731 = vmatpush1.msra.mxu0 0.0
    %1732 = vmatprep.subr.mxu0 0.0
    %1733 = vmatpush1.msra.mxu0 0.0
    %1734 = vmatprep.subr.mxu0 0.0
    %1735 = vmatpush1.msra.mxu0 0.0
    %1736 = vmatprep.mubr.f32.mxu0 0.0
    %1737 = vmatmul.mubr.f32.gmra.mrb[0].mxu0 %v1524
    %v1738 = vpop.f32.mrb[0].mxu0
    %v1739 = vadd.f32 %v1669, %v1738
    %v1740 = vpop.f32.mrb[0].mxu0
    %1741 = vdwg.mxu0
    %v1742 = vadd.f32 %v1739, %v385
    %v1743 = vxor.u32 %v1596, 2147483648
    %v1744 = vmul.f32 %v1743, 1.442695
    %v1745 = vpow.pop %v1744
    %v1746 = vadd.f32 %v1745, 1.0
    %v1747 = vrcp.pop %v1746
    %v1748 = vmul.f32 1.0, %v1747
    %v1749 = vtanh.pop %v1596
    %v1750 = vmul.f32 %v1748, %v1489
    %1752 = vrot.lane.b32.xlu0 %v1749, 32
    %v1753 = vpop.permute.xlu0 %1752
    %v1755 = vmul.f32 %v1748, %v1753
    %1757 = vrot.lane.b32.xlu0 %v1755, 32
    %v1758 = vpop.permute.xlu0 %1757
    %v1760 = vadd.f32 %v1750, %v1758
    %v1761 = vtanh.pop %v1760
    %1763 = vrot.lane.b32.xlu0 %v1761, 32
    %v1764 = vpop.permute.xlu0 %1763
    %v1766 = vmul.f32 %v1748, %v1764
    %v1767 = vxor.u32 %v1742, 2147483648
    %v1768 = vmul.f32 %v1767, 1.442695
    %v1769 = vpow.pop %v1768
    %v1770 = vadd.f32 %v1769, 1.0
    %v1771 = vrcp.pop %v1770
    %v1772 = vmul.f32 1.0, %v1771
    %v1773 = vtanh.pop %v1742
    %v1774 = vmul.f32 %v1772, %v1513
    %1776 = vrot.lane.b32.xlu0 %v1773, 32
    %v1777 = vpop.permute.xlu0 %1776
    %v1779 = vmul.f32 %v1772, %v1777
    %1781 = vrot.lane.b32.xlu0 %v1779, 32
    %v1782 = vpop.permute.xlu0 %1781
    %v1784 = vadd.f32 %v1774, %v1782
    %v1785 = vtanh.pop %v1784
    %1787 = vrot.lane.b32.xlu0 %v1785, 32
    %v1788 = vpop.permute.xlu0 %1787
    %v1790 = vmul.f32 %v1772, %v1788
    %v1791 = vld [vmem:[#allocation2 + $0xe] sm:$0x3]
    %1793 = vrot.lane.b32.xlu0 %v1766, 64
    %v1794 = vpop.permute.xlu0 %1793
    %v1795 = vsel %vm164, %v1794, 0
    %1797 = vmatprep.subr.mxu0 0.0
    %1798 = vmatpush1.msra.mxu0 %v122
    %1799 = vmatprep.subr.mxu0 0.0
    %1800 = vmatpush1.msra.mxu0 %v123
    %1801 = vmatprep.subr.mxu0 0.0
    %1802 = vmatpush1.msra.mxu0 %v124
    %1803 = vmatprep.subr.mxu0 0.0
    %1804 = vmatpush1.msra.mxu0 %v125
    %1805 = vmatprep.subr.mxu0 0.0
    %1806 = vmatpush1.msra.mxu0 0.0
    %1807 = vmatprep.subr.mxu0 0.0
    %1808 = vmatpush1.msra.mxu0 0.0
    %1809 = vmatprep.subr.mxu0 0.0
    %1810 = vmatpush1.msra.mxu0 0.0
    %1811 = vmatprep.subr.mxu0 0.0
    %1812 = vmatpush1.msra.mxu0 0.0
    %1813 = vmatprep.subr.mxu0 0.0
    %1814 = vmatpush1.msra.mxu0 0.0
    %1815 = vmatprep.subr.mxu0 0.0
    %1816 = vmatpush1.msra.mxu0 0.0
    %1817 = vmatprep.subr.mxu0 0.0
    %1818 = vmatpush1.msra.mxu0 0.0
    %1819 = vmatprep.subr.mxu0 0.0
    %1820 = vmatpush1.msra.mxu0 0.0
    %1821 = vmatprep.subr.mxu0 0.0
    %1822 = vmatpush1.msra.mxu0 0.0
    %1823 = vmatprep.subr.mxu0 0.0
    %1824 = vmatpush1.msra.mxu0 0.0
    %1825 = vmatprep.subr.mxu0 0.0
    %1826 = vmatpush1.msra.mxu0 0.0
    %1827 = vmatprep.subr.mxu0 0.0
    %1828 = vmatpush1.msra.mxu0 0.0
    %1829 = vmatprep.subr.mxu0 0.0
    %1830 = vmatpush1.msra.mxu0 0.0
    %1831 = vmatprep.subr.mxu0 0.0
    %1832 = vmatpush1.msra.mxu0 0.0
    %1833 = vmatprep.subr.mxu0 0.0
    %1834 = vmatpush1.msra.mxu0 0.0
    %1835 = vmatprep.subr.mxu0 0.0
    %1836 = vmatpush1.msra.mxu0 0.0
    %1837 = vmatprep.subr.mxu0 0.0
    %1838 = vmatpush1.msra.mxu0 0.0
    %1839 = vmatprep.subr.mxu0 0.0
    %1840 = vmatpush1.msra.mxu0 0.0
    %1841 = vmatprep.subr.mxu0 0.0
    %1842 = vmatpush1.msra.mxu0 0.0
    %1843 = vmatprep.subr.mxu0 0.0
    %1844 = vmatpush1.msra.mxu0 0.0
    %1845 = vmatprep.subr.mxu0 0.0
    %1846 = vmatpush1.msra.mxu0 0.0
    %1847 = vmatprep.subr.mxu0 0.0
    %1848 = vmatpush1.msra.mxu0 0.0
    %1849 = vmatprep.subr.mxu0 0.0
    %1850 = vmatpush1.msra.mxu0 0.0
    %1851 = vmatprep.subr.mxu0 0.0
    %1852 = vmatpush1.msra.mxu0 0.0
    %1853 = vmatprep.subr.mxu0 0.0
    %1854 = vmatpush1.msra.mxu0 0.0
    %1855 = vmatprep.subr.mxu0 0.0
    %1856 = vmatpush1.msra.mxu0 0.0
    %1857 = vmatprep.subr.mxu0 0.0
    %1858 = vmatpush1.msra.mxu0 0.0
    %1859 = vmatprep.subr.mxu0 0.0
    %1860 = vmatpush1.msra.mxu0 0.0
    %1861 = vmatprep.mubr.f32.mxu0 0.0
    %1862 = vmatmul.mubr.f32.gmra.mrb[0].mxu0 %v1795
    %v1863 = vpop.f32.mrb[0].mxu0
    %v1864 = vadd.f32 0.0, %v1863
    %v1865 = vpop.f32.mrb[0].mxu0
    %1866 = vdwg.mxu0
    %v1867 = vadd.f32 %v1791, %v1864
    %1869 = vrot.lane.b32.xlu0 %v1790, 64
    %v1870 = vpop.permute.xlu0 %1869
    %v1871 = vsel %vm164, %v1870, 0
    %1873 = vmatprep.subr.mxu0 0.0
    %1874 = vmatpush1.msra.mxu0 %v130
    %1875 = vmatprep.subr.mxu0 0.0
    %1876 = vmatpush1.msra.mxu0 %v131
    %1877 = vmatprep.subr.mxu0 0.0
    %1878 = vmatpush1.msra.mxu0 %v132
    %1879 = vmatprep.subr.mxu0 0.0
    %1880 = vmatpush1.msra.mxu0 %v133
    %1881 = vmatprep.subr.mxu0 0.0
    %1882 = vmatpush1.msra.mxu0 0.0
    %1883 = vmatprep.subr.mxu0 0.0
    %1884 = vmatpush1.msra.mxu0 0.0
    %1885 = vmatprep.subr.mxu0 0.0
    %1886 = vmatpush1.msra.mxu0 0.0
    %1887 = vmatprep.subr.mxu0 0.0
    %1888 = vmatpush1.msra.mxu0 0.0
    %1889 = vmatprep.subr.mxu0 0.0
    %1890 = vmatpush1.msra.mxu0 0.0
    %1891 = vmatprep.subr.mxu0 0.0
    %1892 = vmatpush1.msra.mxu0 0.0
    %1893 = vmatprep.subr.mxu0 0.0
    %1894 = vmatpush1.msra.mxu0 0.0
    %1895 = vmatprep.subr.mxu0 0.0
    %1896 = vmatpush1.msra.mxu0 0.0
    %1897 = vmatprep.subr.mxu0 0.0
    %1898 = vmatpush1.msra.mxu0 0.0
    %1899 = vmatprep.subr.mxu0 0.0
    %1900 = vmatpush1.msra.mxu0 0.0
    %1901 = vmatprep.subr.mxu0 0.0
    %1902 = vmatpush1.msra.mxu0 0.0
    %1903 = vmatprep.subr.mxu0 0.0
    %1904 = vmatpush1.msra.mxu0 0.0
    %1905 = vmatprep.subr.mxu0 0.0
    %1906 = vmatpush1.msra.mxu0 0.0
    %1907 = vmatprep.subr.mxu0 0.0
    %1908 = vmatpush1.msra.mxu0 0.0
    %1909 = vmatprep.subr.mxu0 0.0
    %1910 = vmatpush1.msra.mxu0 0.0
    %1911 = vmatprep.subr.mxu0 0.0
    %1912 = vmatpush1.msra.mxu0 0.0
    %1913 = vmatprep.subr.mxu0 0.0
    %1914 = vmatpush1.msra.mxu0 0.0
    %1915 = vmatprep.subr.mxu0 0.0
    %1916 = vmatpush1.msra.mxu0 0.0
    %1917 = vmatprep.subr.mxu0 0.0
    %1918 = vmatpush1.msra.mxu0 0.0
    %1919 = vmatprep.subr.mxu0 0.0
    %1920 = vmatpush1.msra.mxu0 0.0
    %1921 = vmatprep.subr.mxu0 0.0
    %1922 = vmatpush1.msra.mxu0 0.0
    %1923 = vmatprep.subr.mxu0 0.0
    %1924 = vmatpush1.msra.mxu0 0.0
    %1925 = vmatprep.subr.mxu0 0.0
    %1926 = vmatpush1.msra.mxu0 0.0
    %1927 = vmatprep.subr.mxu0 0.0
    %1928 = vmatpush1.msra.mxu0 0.0
    %1929 = vmatprep.subr.mxu0 0.0
    %1930 = vmatpush1.msra.mxu0 0.0
    %1931 = vmatprep.subr.mxu0 0.0
    %1932 = vmatpush1.msra.mxu0 0.0
    %1933 = vmatprep.subr.mxu0 0.0
    %1934 = vmatpush1.msra.mxu0 0.0
    %1935 = vmatprep.subr.mxu0 0.0
    %1936 = vmatpush1.msra.mxu0 0.0
    %1937 = vmatprep.mubr.f32.mxu0 0.0
    %1938 = vmatmul.mubr.f32.gmra.mrb[0].mxu0 %v1871
    %v1939 = vpop.f32.mrb[0].mxu0
    %v1940 = vadd.f32 0.0, %v1939
    %v1941 = vpop.f32.mrb[0].mxu0
    %1942 = vdwg.mxu0
    %1943 = vmatprep.subr.mxu0 0.0
    %1944 = vmatpush1.msra.mxu0 %v126
    %1945 = vmatprep.subr.mxu0 0.0
    %1946 = vmatpush1.msra.mxu0 %v127
    %1947 = vmatprep.subr.mxu0 0.0
    %1948 = vmatpush1.msra.mxu0 %v128
    %1949 = vmatprep.subr.mxu0 0.0
    %1950 = vmatpush1.msra.mxu0 %v129
    %1951 = vmatprep.subr.mxu0 0.0
    %1952 = vmatpush1.msra.mxu0 0.0
    %1953 = vmatprep.subr.mxu0 0.0
    %1954 = vmatpush1.msra.mxu0 0.0
    %1955 = vmatprep.subr.mxu0 0.0
    %1956 = vmatpush1.msra.mxu0 0.0
    %1957 = vmatprep.subr.mxu0 0.0
    %1958 = vmatpush1.msra.mxu0 0.0
    %1959 = vmatprep.subr.mxu0 0.0
    %1960 = vmatpush1.msra.mxu0 0.0
    %1961 = vmatprep.subr.mxu0 0.0
    %1962 = vmatpush1.msra.mxu0 0.0
    %1963 = vmatprep.subr.mxu0 0.0
    %1964 = vmatpush1.msra.mxu0 0.0
    %1965 = vmatprep.subr.mxu0 0.0
    %1966 = vmatpush1.msra.mxu0 0.0
    %1967 = vmatprep.subr.mxu0 0.0
    %1968 = vmatpush1.msra.mxu0 0.0
    %1969 = vmatprep.subr.mxu0 0.0
    %1970 = vmatpush1.msra.mxu0 0.0
    %1971 = vmatprep.subr.mxu0 0.0
    %1972 = vmatpush1.msra.mxu0 0.0
    %1973 = vmatprep.subr.mxu0 0.0
    %1974 = vmatpush1.msra.mxu0 0.0
    %1975 = vmatprep.subr.mxu0 0.0
    %1976 = vmatpush1.msra.mxu0 0.0
    %1977 = vmatprep.subr.mxu0 0.0
    %1978 = vmatpush1.msra.mxu0 0.0
    %1979 = vmatprep.subr.mxu0 0.0
    %1980 = vmatpush1.msra.mxu0 0.0
    %1981 = vmatprep.subr.mxu0 0.0
    %1982 = vmatpush1.msra.mxu0 0.0
    %1983 = vmatprep.subr.mxu0 0.0
    %1984 = vmatpush1.msra.mxu0 0.0
    %1985 = vmatprep.subr.mxu0 0.0
    %1986 = vmatpush1.msra.mxu0 0.0
    %1987 = vmatprep.subr.mxu0 0.0
    %1988 = vmatpush1.msra.mxu0 0.0
    %1989 = vmatprep.subr.mxu0 0.0
    %1990 = vmatpush1.msra.mxu0 0.0
    %1991 = vmatprep.subr.mxu0 0.0
    %1992 = vmatpush1.msra.mxu0 0.0
    %1993 = vmatprep.subr.mxu0 0.0
    %1994 = vmatpush1.msra.mxu0 0.0
    %1995 = vmatprep.subr.mxu0 0.0
    %1996 = vmatpush1.msra.mxu0 0.0
    %1997 = vmatprep.subr.mxu0 0.0
    %1998 = vmatpush1.msra.mxu0 0.0
    %1999 = vmatprep.subr.mxu0 0.0
    %2000 = vmatpush1.msra.mxu0 0.0
    %2001 = vmatprep.subr.mxu0 0.0
    %2002 = vmatpush1.msra.mxu0 0.0
    %2003 = vmatprep.subr.mxu0 0.0
    %2004 = vmatpush1.msra.mxu0 0.0
    %2005 = vmatprep.subr.mxu0 0.0
    %2006 = vmatpush1.msra.mxu0 0.0
    %2007 = vmatprep.mubr.f32.mxu0 0.0
    %2008 = vmatmul.mubr.f32.gmra.mrb[0].mxu0 %v1795
    %v2009 = vpop.f32.mrb[0].mxu0
    %v2010 = vadd.f32 %v1940, %v2009
    %v2011 = vpop.f32.mrb[0].mxu0
    %2012 = vdwg.mxu0
    %v2013 = vadd.f32 %v2010, %v385
    %v2014 = vxor.u32 %v1867, 2147483648
    %v2015 = vmul.f32 %v2014, 1.442695
    %v2016 = vpow.pop %v2015
    %v2017 = vadd.f32 %v2016, 1.0
    %v2018 = vrcp.pop %v2017
    %v2019 = vmul.f32 1.0, %v2018
    %v2020 = vtanh.pop %v1867
    %v2021 = vmul.f32 %v2019, %v1760
    %2023 = vrot.lane.b32.xlu0 %v2020, 32
    %v2024 = vpop.permute.xlu0 %2023
    %v2026 = vmul.f32 %v2019, %v2024
    %2028 = vrot.lane.b32.xlu0 %v2026, 32
    %v2029 = vpop.permute.xlu0 %2028
    %v2031 = vadd.f32 %v2021, %v2029
    %v2032 = vtanh.pop %v2031
    %2034 = vrot.lane.b32.xlu0 %v2032, 32
    %v2035 = vpop.permute.xlu0 %2034
    %v2037 = vmul.f32 %v2019, %v2035
    %v2038 = vxor.u32 %v2013, 2147483648
    %v2039 = vmul.f32 %v2038, 1.442695
    %v2040 = vpow.pop %v2039
    %v2041 = vadd.f32 %v2040, 1.0
    %v2042 = vrcp.pop %v2041
    %v2043 = vmul.f32 1.0, %v2042
    %v2044 = vtanh.pop %v2013
    %v2045 = vmul.f32 %v2043, %v1784
    %2047 = vrot.lane.b32.xlu0 %v2044, 32
    %v2048 = vpop.permute.xlu0 %2047
    %v2050 = vmul.f32 %v2043, %v2048
    %2052 = vrot.lane.b32.xlu0 %v2050, 32
    %v2053 = vpop.permute.xlu0 %2052
    %v2055 = vadd.f32 %v2045, %v2053
    %v2056 = vtanh.pop %v2055
    %2058 = vrot.lane.b32.xlu0 %v2056, 32
    %v2059 = vpop.permute.xlu0 %2058
    %v2061 = vmul.f32 %v2043, %v2059
    %2063 = vrot.lane.b32.xlu0 %v2061, 64
    %v2064 = vpop.permute.xlu0 %2063
    %v2065 = vsel %vm164, %v2064, 0
    %2067 = vmatprep.subr.mxu0 0.0
    %2068 = vmatpush1.msra.mxu0 %v130
    %2069 = vmatprep.subr.mxu0 0.0
    %2070 = vmatpush1.msra.mxu0 %v131
    %2071 = vmatprep.subr.mxu0 0.0
    %2072 = vmatpush1.msra.mxu0 %v132
    %2073 = vmatprep.subr.mxu0 0.0
    %2074 = vmatpush1.msra.mxu0 %v133
    %2075 = vmatprep.subr.mxu0 0.0
    %2076 = vmatpush1.msra.mxu0 0.0
    %2077 = vmatprep.subr.mxu0 0.0
    %2078 = vmatpush1.msra.mxu0 0.0
    %2079 = vmatprep.subr.mxu0 0.0
    %2080 = vmatpush1.msra.mxu0 0.0
    %2081 = vmatprep.subr.mxu0 0.0
    %2082 = vmatpush1.msra.mxu0 0.0
    %2083 = vmatprep.subr.mxu0 0.0
    %2084 = vmatpush1.msra.mxu0 0.0
    %2085 = vmatprep.subr.mxu0 0.0
    %2086 = vmatpush1.msra.mxu0 0.0
    %2087 = vmatprep.subr.mxu0 0.0
    %2088 = vmatpush1.msra.mxu0 0.0
    %2089 = vmatprep.subr.mxu0 0.0
    %2090 = vmatpush1.msra.mxu0 0.0
    %2091 = vmatprep.subr.mxu0 0.0
    %2092 = vmatpush1.msra.mxu0 0.0
    %2093 = vmatprep.subr.mxu0 0.0
    %2094 = vmatpush1.msra.mxu0 0.0
    %2095 = vmatprep.subr.mxu0 0.0
    %2096 = vmatpush1.msra.mxu0 0.0
    %2097 = vmatprep.subr.mxu0 0.0
    %2098 = vmatpush1.msra.mxu0 0.0
    %2099 = vmatprep.subr.mxu0 0.0
    %2100 = vmatpush1.msra.mxu0 0.0
    %2101 = vmatprep.subr.mxu0 0.0
    %2102 = vmatpush1.msra.mxu0 0.0
    %2103 = vmatprep.subr.mxu0 0.0
    %2104 = vmatpush1.msra.mxu0 0.0
    %2105 = vmatprep.subr.mxu0 0.0
    %2106 = vmatpush1.msra.mxu0 0.0
    %2107 = vmatprep.subr.mxu0 0.0
    %2108 = vmatpush1.msra.mxu0 0.0
    %2109 = vmatprep.subr.mxu0 0.0
    %2110 = vmatpush1.msra.mxu0 0.0
    %2111 = vmatprep.subr.mxu0 0.0
    %2112 = vmatpush1.msra.mxu0 0.0
    %2113 = vmatprep.subr.mxu0 0.0
    %2114 = vmatpush1.msra.mxu0 0.0
    %2115 = vmatprep.subr.mxu0 0.0
    %2116 = vmatpush1.msra.mxu0 0.0
    %2117 = vmatprep.subr.mxu0 0.0
    %2118 = vmatpush1.msra.mxu0 0.0
    %2119 = vmatprep.subr.mxu0 0.0
    %2120 = vmatpush1.msra.mxu0 0.0
    %2121 = vmatprep.subr.mxu0 0.0
    %2122 = vmatpush1.msra.mxu0 0.0
    %2123 = vmatprep.subr.mxu0 0.0
    %2124 = vmatpush1.msra.mxu0 0.0
    %2125 = vmatprep.subr.mxu0 0.0
    %2126 = vmatpush1.msra.mxu0 0.0
    %2127 = vmatprep.subr.mxu0 0.0
    %2128 = vmatpush1.msra.mxu0 0.0
    %2129 = vmatprep.subr.mxu0 0.0
    %2130 = vmatpush1.msra.mxu0 0.0
    %2131 = vmatprep.mubr.f32.mxu0 0.0
    %2132 = vmatmul.mubr.f32.gmra.mrb[0].mxu0 %v2065
    %v2133 = vpop.f32.mrb[0].mxu0
    %v2134 = vadd.f32 0.0, %v2133
    %v2135 = vpop.f32.mrb[0].mxu0
    %2136 = vdwg.mxu0
    %2138 = vrot.lane.b32.xlu0 %v2037, 64
    %v2139 = vpop.permute.xlu0 %2138
    %v2140 = vsel %vm164, %v2139, 0
    %2142 = vmatprep.subr.mxu0 0.0
    %2143 = vmatpush1.msra.mxu0 %v126
    %2144 = vmatprep.subr.mxu0 0.0
    %2145 = vmatpush1.msra.mxu0 %v127
    %2146 = vmatprep.subr.mxu0 0.0
    %2147 = vmatpush1.msra.mxu0 %v128
    %2148 = vmatprep.subr.mxu0 0.0
    %2149 = vmatpush1.msra.mxu0 %v129
    %2150 = vmatprep.subr.mxu0 0.0
    %2151 = vmatpush1.msra.mxu0 0.0
    %2152 = vmatprep.subr.mxu0 0.0
    %2153 = vmatpush1.msra.mxu0 0.0
    %2154 = vmatprep.subr.mxu0 0.0
    %2155 = vmatpush1.msra.mxu0 0.0
    %2156 = vmatprep.subr.mxu0 0.0
    %2157 = vmatpush1.msra.mxu0 0.0
    %2158 = vmatprep.subr.mxu0 0.0
    %2159 = vmatpush1.msra.mxu0 0.0
    %2160 = vmatprep.subr.mxu0 0.0
    %2161 = vmatpush1.msra.mxu0 0.0
    %2162 = vmatprep.subr.mxu0 0.0
    %2163 = vmatpush1.msra.mxu0 0.0
    %2164 = vmatprep.subr.mxu0 0.0
    %2165 = vmatpush1.msra.mxu0 0.0
    %2166 = vmatprep.subr.mxu0 0.0
    %2167 = vmatpush1.msra.mxu0 0.0
    %2168 = vmatprep.subr.mxu0 0.0
    %2169 = vmatpush1.msra.mxu0 0.0
    %2170 = vmatprep.subr.mxu0 0.0
    %2171 = vmatpush1.msra.mxu0 0.0
    %2172 = vmatprep.subr.mxu0 0.0
    %2173 = vmatpush1.msra.mxu0 0.0
    %2174 = vmatprep.subr.mxu0 0.0
    %2175 = vmatpush1.msra.mxu0 0.0
    %2176 = vmatprep.subr.mxu0 0.0
    %2177 = vmatpush1.msra.mxu0 0.0
    %2178 = vmatprep.subr.mxu0 0.0
    %2179 = vmatpush1.msra.mxu0 0.0
    %2180 = vmatprep.subr.mxu0 0.0
    %2181 = vmatpush1.msra.mxu0 0.0
    %2182 = vmatprep.subr.mxu0 0.0
    %2183 = vmatpush1.msra.mxu0 0.0
    %2184 = vmatprep.subr.mxu0 0.0
    %2185 = vmatpush1.msra.mxu0 0.0
    %2186 = vmatprep.subr.mxu0 0.0
    %2187 = vmatpush1.msra.mxu0 0.0
    %2188 = vmatprep.subr.mxu0 0.0
    %2189 = vmatpush1.msra.mxu0 0.0
    %2190 = vmatprep.subr.mxu0 0.0
    %2191 = vmatpush1.msra.mxu0 0.0
    %2192 = vmatprep.subr.mxu0 0.0
    %2193 = vmatpush1.msra.mxu0 0.0
    %2194 = vmatprep.subr.mxu0 0.0
    %2195 = vmatpush1.msra.mxu0 0.0
    %2196 = vmatprep.subr.mxu0 0.0
    %2197 = vmatpush1.msra.mxu0 0.0
    %2198 = vmatprep.subr.mxu0 0.0
    %2199 = vmatpush1.msra.mxu0 0.0
    %2200 = vmatprep.subr.mxu0 0.0
    %2201 = vmatpush1.msra.mxu0 0.0
    %2202 = vmatprep.subr.mxu0 0.0
    %2203 = vmatpush1.msra.mxu0 0.0
    %2204 = vmatprep.subr.mxu0 0.0
    %2205 = vmatpush1.msra.mxu0 0.0
    %2206 = vmatprep.mubr.f32.mxu0 0.0
    %2207 = vmatmul.mubr.f32.gmra.mrb[0].mxu0 %v2140
    %v2208 = vpop.f32.mrb[0].mxu0
    %v2209 = vadd.f32 %v2134, %v2208
    %v2210 = vpop.f32.mrb[0].mxu0
    %2211 = vdwg.mxu0
    %v2212 = vadd.f32 %v2209, %v385
    %v2213 = vxor.u32 %v2212, 2147483648
    %v2214 = vmul.f32 %v2213, 1.442695
    %v2215 = vpow.pop %v2214
    %v2216 = vadd.f32 %v2215, 1.0
    %v2217 = vrcp.pop %v2216
    %v2218 = vmul.f32 1.0, %v2217
    %v2219 = vtanh.pop %v2212
    %v2220 = vmul.f32 %v2218, %v2055
    %2222 = vrot.lane.b32.xlu0 %v2219, 32
    %v2223 = vpop.permute.xlu0 %2222
    %v2225 = vmul.f32 %v2218, %v2223
    %2227 = vrot.lane.b32.xlu0 %v2225, 32
    %v2228 = vpop.permute.xlu0 %2227
    %v2230 = vadd.f32 %v2220, %v2228
    %v2231 = vtanh.pop %v2230
    %2233 = vrot.lane.b32.xlu0 %v2231, 32
    %v2234 = vpop.permute.xlu0 %2233
    %v2236 = vmul.f32 %v2218, %v2234
    %2238 = vrot.lane.b32.xlu0 %v2236, 64
    %v2239 = vpop.permute.xlu0 %2238
    %vm2241 = vcmask 254976
    %2242 = vst.msk [vmem:[#allocation3] sm:$0x3] %vm2241, %v2239
    // Predicated region
    $region30: #{_lambda_.1} parent=1 // pred_check
      _
    $region31: #{_lambda_.1} parent=1 // pred_check_branch
      %2244 = sbr.rel (0) target = $region33
    $region32: #{_lambda_.1} parent=1 // pred_region
      %s2246 = ssub.s32 32, 32
      %2247 = vsyncadd [#allocation4], %s2246
      %s2249 = sshll.u32 [#allocation3], 4
      %s2250 = int_to_ptr.vmem [resolvable:$true] %s2249
      %2252 = dma.vmem_to_hbm [thread:$0]  %s2250, 32, %s7, [#allocation4]
    $region33: #{_lambda_.1} parent=1 // pred_fallthru
      _
    // Predicated region
    $region34: #{_lambda_.1} parent=1 // pred_check
      _
    $region35: #{_lambda_.1} parent=1 // pred_check_branch
      %2254 = sbr.rel (0) target = $region37
    $region36: #{_lambda_.1} parent=1 // pred_region
      %2255 = dma.done [#allocation4], 32
    $region37: #{_lambda_.1} parent=1 // pred_fallthru
      _
    %2256 = vsyncpa [#allocation4], 1

</llo_original>
